<compile_context>
chip_gen: v7x
topology: tpu7x:2x2x1
jax: 0.10.0
libtpu: 0.0.40
codegen_flags: <defaults>
</compile_context>

<pallas_src>
import functools

import jax
import jax.numpy as jnp
from jax.experimental import pallas as pl
from jax.experimental.pallas import tpu as pltpu

_C1, _C2, _C3 = 16, 32, 2   # conv output channels of the torch module
_C3_PAD = 8                 # layer 3 is computed with Cout padded 2 -> 8


def _round_up(n, m):
    return ((n + m - 1) // m) * m


def _shift_flat(x, d):
    """out[:, p] = x[:, p + d], zero-filled at the flat array boundaries."""
    if d == 0:
        return x
    c, p = x.shape
    zeros = jnp.zeros((c, abs(d)), x.dtype)
    if d > 0:
        return jnp.concatenate([x[:, d:], zeros], axis=1)
    return jnp.concatenate([zeros, x[:, :p + d]], axis=1)


def _conv3x3_relu(act, w_ref, b_ref, w_img, not_first_col, not_last_col):
    """3x3 'same' conv + bias + ReLU as 3 ky-grouped accumulating MXU matmuls.

    act:   (Cin, P) bf16, P = H*W flattened row-major (NCHW pixel order).
    w_ref: (3, Cout, 3*Cin) bf16 ref; w_ref[ky][o, kx*Cin + ci] = W[o, ci, ky, kx].
    b_ref: (Cout, 1) f32 ref.
    Returns (Cout, P) f32.
    """
    zero = jnp.array(0, act.dtype)
    # kx = 0 / 2 taps of the *un-row-shifted* map: +/-1 lane shift + column
    # border mask.  Masking before the row shift is equivalent to masking after
    # it because the row shift moves pixels by whole multiples of W.
    left = jnp.where(not_first_col, _shift_flat(act, -1), zero)
    right = jnp.where(not_last_col, _shift_flat(act, 1), zero)
    base = jnp.concatenate([left, act, right], axis=0)         # (3*Cin, P) bf16

    acc = None
    for ky in range(3):
        # Tap (ky, kx) reads pixel (i+ky-1, j+kx-1): the row part is a flat
        # lane shift of the kx slab by (ky-1)*W; row under/overflow falls off
        # the flat ends (zero fill).
        grp = _shift_flat(base, (ky - 1) * w_img)              # (3*Cin, P) bf16
        part = jax.lax.dot_general(                            # K = 3*Cin, N = P
            w_ref[ky], grp,
            dimension_numbers=(((1,), (0,)), ((), ())),
            preferred_element_type=jnp.float32)                # (Cout, P) f32
        acc = part if acc is None else acc + part
    return jnp.maximum(acc + b_ref[...], 0.0)


def edge_kernel(x_ref, w1_ref, b1_ref, w2_ref, b2_ref, w3_ref, b3_ref,
                f1_ref, f2_ref, f3_ref, *, w_img):
    p = x_ref.shape[1]
    col = jax.lax.broadcasted_iota(jnp.int32, (1, p), 1) % w_img
    not_first_col = col > 0               # pixel is not in image column 0
    not_last_col = col < (w_img - 1)      # pixel is not in image column W-1

    # ---- layer 1: Ci(pad) -> 16 ----------------------------------------------
    a1 = _conv3x3_relu(x_ref[...], w1_ref, b1_ref, w_img,
                       not_first_col, not_last_col)
    f1_ref[...] = a1                       # (16, H*W) f32, lane-dense NCHW store

    # ---- layer 2: 16 -> 32 ----------------------------------------------------
    a2 = _conv3x3_relu(a1.astype(jnp.bfloat16), w2_ref, b2_ref, w_img,
                       not_first_col, not_last_col)
    f2_ref[...] = a2

    # ---- layer 3: 32 -> 2 (computed padded to 8 channels) ---------------------
    a3 = _conv3x3_relu(a2.astype(jnp.bfloat16), w3_ref, b3_ref, w_img,
                       not_first_col, not_last_col)
    f3_ref[...] = a3[0:f3_ref.shape[0]]    # keep the 2 real channels only


def _prep_weight(w_oihw, cin_pad=None):
    """PyTorch Conv2d weight (Cout, Cin, 3, 3) -> (3, Cout, 3*cin_pad) bf16,
    so that w[ky][o, kx*cin_pad + ci] multiplies the (kx, ci) row of the kernel's
    per-ky slab.  Padded cin rows are zero."""
    cout, cin = w_oihw.shape[0], w_oihw.shape[1]
    cin_pad = cin if cin_pad is None else cin_pad
    w = jnp.transpose(w_oihw, (2, 0, 3, 1))                    # (ky, cout, kx, cin)
    w = jnp.pad(w, ((0, 0), (0, 0), (0, 0), (0, cin_pad - cin)))
    return w.reshape(3, cout, 3 * cin_pad).astype(jnp.bfloat16)


def _vmem_limit_bytes(ci_pad, p):
    """Per-grid-step working-set estimate, clamped to a range that is safe on
    v5e/v6e (128 MiB physical) and v7x (64 MiB physical)."""
    bf16, f32 = 2, 4
    est = (
        2 * ci_pad * p * bf16                        # double-buffered input block
        + 2 * (_C1 + _C2 + _C3) * p * f32            # double-buffered output blocks
        + (_C1 + _C2) * p * f32                      # a1 / a2 live across layers
        + 2 * 3 * _C2 * p * bf16                     # layer-3 kx slab + shifted copy
        + 2 * _C2 * p * f32                          # f32 matmul partial + accumulator
        + 2 * (3 * _C1 * 3 * ci_pad + 3 * _C2 * 3 * _C1
               + 3 * _C3_PAD * 3 * _C2) * bf16       # double-buffered weights
    )
    return int(min(max(2 * est, 32 << 20), 48 << 20))


def edge_feature_extractor(x_nchw, params):
    """params: ((w1, b1), (w2, b2), (w3, b3)) in PyTorch layouts.
    Returns (feature_1, feature_2, feature_3) in NCHW float32, matching the
    torch module's forward."""
    (w1, b1), (w2, b2), (w3, b3) = params
    B, Ci, H, W = x_nchw.shape
    P = H * W
    Ci_pad = _round_up(max(Ci, 8), 8)   # sublane-align the layer-1 input slabs

    # Free reshape + bf16 cast; channel zero-pad only (no NCHW<->NHWC transpose,
    # no spatial jnp.pad).
    x = x_nchw.reshape(B, Ci, P).astype(jnp.bfloat16)
    if Ci_pad != Ci:
        x = jnp.pad(x, ((0, 0), (0, Ci_pad - Ci), (0, 0)))

    w1p = _prep_weight(w1, Ci_pad)
    w2p = _prep_weight(w2)
    w3p = jnp.pad(_prep_weight(w3), ((0, 0), (0, _C3_PAD - _C3), (0, 0)))
    b1p = b1.reshape(-1, 1).astype(jnp.float32)
    b2p = b2.reshape(-1, 1).astype(jnp.float32)
    b3p = jnp.pad(b3.reshape(-1, 1).astype(jnp.float32),
                  ((0, _C3_PAD - _C3), (0, 0)))

    def _whole(shape):   # weights/biases: whole array, same block every step
        return pl.BlockSpec(shape, lambda b: (0,) * len(shape))

    f1, f2, f3 = pl.pallas_call(
        functools.partial(edge_kernel, w_img=W),
        out_shape=(
            jax.ShapeDtypeStruct((B, _C1, P), jnp.float32),
            jax.ShapeDtypeStruct((B, _C2, P), jnp.float32),
            jax.ShapeDtypeStruct((B, _C3, P), jnp.float32),
        ),
        grid=(B,),
        in_specs=[
            pl.BlockSpec((None, Ci_pad, P), lambda b: (b, 0, 0)),
            _whole((3, _C1, 3 * Ci_pad)), _whole((_C1, 1)),
            _whole((3, _C2, 3 * _C1)), _whole((_C2, 1)),
            _whole((3, _C3_PAD, 3 * _C2)), _whole((_C3_PAD, 1)),
        ],
        out_specs=(
            pl.BlockSpec((None, _C1, P), lambda b: (b, 0, 0)),
            pl.BlockSpec((None, _C2, P), lambda b: (b, 0, 0)),
            pl.BlockSpec((None, _C3, P), lambda b: (b, 0, 0)),
        ),
        compiler_params=pltpu.CompilerParams(
            dimension_semantics=("parallel",),   # megacore-shard the batch (v7x)
            vmem_limit_bytes=_vmem_limit_bytes(Ci_pad, P),
        ),
    )(x, w1p, b1p, w2p, b2p, w3p, b3p)

    # (B, C, H*W) is already NCHW-contiguous: these reshapes are free.
    return (f1.reshape(B, _C1, H, W),
            f2.reshape(B, _C2, H, W),
            f3.reshape(B, _C3, H, W))


def _reference(x_nchw, params):
    """Pure-JAX f32 reference using lax.conv_general_dilated (NCHW, OIHW)."""
    h = x_nchw.astype(jnp.float32)
    feats = []
    for (w, b) in params:
        h = jax.lax.conv_general_dilated(
            h, w.astype(jnp.float32), window_strides=(1, 1),
            padding=((1, 1), (1, 1)),
            dimension_numbers=("NCHW", "OIHW", "NCHW"))
        h = jnp.maximum(h + b.reshape(1, -1, 1, 1), 0.0)
        feats.append(h)
    return tuple(feats)


def _init_params(key, ci):
    """Deterministic synthetic init matching the torch module's shapes."""
    ks = jax.random.split(key, 6)

    def conv_params(kw, kb, cin, cout):
        w = 0.1 * jax.random.normal(kw, (cout, cin, 3, 3), jnp.float32)
        b = 0.1 * jax.random.normal(kb, (cout,), jnp.float32)
        return (w, b)

    return (conv_params(ks[0], ks[1], ci, _C1),
            conv_params(ks[2], ks[3], _C1, _C2),
            conv_params(ks[4], ks[5], _C2, _C3))


if __name__ == "__main__":
    key = jax.random.PRNGKey(0)
    kx, kp = jax.random.split(key)

    B, Ci, H, W = 2, 4, 16, 16
    x = jax.random.normal(kx, (B, Ci, H, W), jnp.float32)    # NCHW, like PyTorch
    params = _init_params(kp, Ci)

    fwd = jax.jit(edge_feature_extractor)
    f1, f2, f3 = fwd(x, params)
    jax.block_until_ready((f1, f2, f3))

    r1, r2, r3 = _reference(x, params)
    assert f1.shape == (B, _C1, H, W)
    assert f2.shape == (B, _C2, H, W)
    assert f3.shape == (B, _C3, H, W)
    # bf16 MXU operands vs. the f32 reference -> loose tolerance; a structural
    # bug (wrong tap order / border handling) would give O(1) errors.
    for got, ref in ((f1, r1), (f2, r2), (f3, r3)):
        assert jnp.allclose(got, ref, atol=1e-1, rtol=1e-1), "mismatch vs reference"

    print("KERNEL_OK")
</pallas_src>

<mosaic_0001>
module attributes {stable_mosaic.version = 11 : i64} {
  func.func @edge_kernel(%arg0: i32, %arg1: memref<1x8x256xbf16, #tpu.memory_space<vmem>>, %arg2: memref<3x16x24xbf16, #tpu.memory_space<vmem>>, %arg3: memref<16x1xf32, #tpu.memory_space<vmem>>, %arg4: memref<3x32x48xbf16, #tpu.memory_space<vmem>>, %arg5: memref<32x1xf32, #tpu.memory_space<vmem>>, %arg6: memref<3x8x96xbf16, #tpu.memory_space<vmem>>, %arg7: memref<8x1xf32, #tpu.memory_space<vmem>>, %arg8: memref<1x16x256xf32, #tpu.memory_space<vmem>>, %arg9: memref<1x32x256xf32, #tpu.memory_space<vmem>>, %arg10: memref<1x2x256xf32, #tpu.memory_space<vmem>>) attributes {dimension_semantics = [#tpu.dimension_semantics<parallel>], iteration_bounds = array<i64: 2>, scalar_prefetch = 0 : i64, scratch_operands = 0 : i64, tpu.core_type = #tpu.core_type<tc>, window_params = [{transform_indices = @transform_0, window_bounds = array<i64: 1, 8, 256>}, {pipeline_mode = #tpu.pipeline_mode<synchronous>, transform_indices = @transform_1, window_bounds = array<i64: 3, 16, 24>}, {pipeline_mode = #tpu.pipeline_mode<synchronous>, transform_indices = @transform_2, window_bounds = array<i64: 16, 1>}, {pipeline_mode = #tpu.pipeline_mode<synchronous>, transform_indices = @transform_3, window_bounds = array<i64: 3, 32, 48>}, {pipeline_mode = #tpu.pipeline_mode<synchronous>, transform_indices = @transform_4, window_bounds = array<i64: 32, 1>}, {pipeline_mode = #tpu.pipeline_mode<synchronous>, transform_indices = @transform_5, window_bounds = array<i64: 3, 8, 96>}, {pipeline_mode = #tpu.pipeline_mode<synchronous>, transform_indices = @transform_6, window_bounds = array<i64: 8, 1>}, {transform_indices = @transform_7, window_bounds = array<i64: 1, 16, 256>}, {transform_indices = @transform_8, window_bounds = array<i64: 1, 32, 256>}, {transform_indices = @transform_9, window_bounds = array<i64: 1, 2, 256>}]} {
    %0 = tpu.iota {dimensions = array<i32: 1>} : vector<1x256xi32>
    %c16_i32 = arith.constant 16 : i32
    %c0_i32 = arith.constant 0 : i32
    %1 = arith.cmpi eq, %c16_i32, %c0_i32 : i32
    %c1_i32 = arith.constant 1 : i32
    %2 = arith.select %1, %c1_i32, %c16_i32 : i32
    %3 = vector.broadcast %2 : i32 to vector<1x256xi32>
    %4 = arith.remsi %0, %3 : vector<1x256xi32>
    %c0_i32_0 = arith.constant 0 : i32
    %5 = vector.broadcast %c0_i32_0 : i32 to vector<1x256xi32>
    %6 = arith.cmpi ne, %4, %5 : vector<1x256xi32>
    %c0_i32_1 = arith.constant 0 : i32
    %7 = vector.broadcast %c0_i32_1 : i32 to vector<1x256xi32>
    %8 = arith.cmpi slt, %4, %7 : vector<1x256xi32>
    %c0_i32_2 = arith.constant 0 : i32
    %9 = arith.cmpi slt, %2, %c0_i32_2 : i32
    %10 = vector.broadcast %9 : i1 to vector<1x256xi1>
    %11 = vector.broadcast %10 : vector<1x256xi1> to vector<1x256xi1>
    %12 = arith.xori %8, %11 : vector<1x256xi1>
    %13 = arith.andi %12, %6 : vector<1x256xi1>
    %14 = vector.broadcast %2 : i32 to vector<1x256xi32>
    %15 = arith.addi %4, %14 : vector<1x256xi32>
    %16 = arith.select %13, %15, %4 : vector<1x256xi1>, vector<1x256xi32>
    %c0_i32_3 = arith.constant 0 : i32
    %17 = vector.broadcast %c0_i32_3 : i32 to vector<1x256xi32>
    %18 = arith.cmpi sgt, %16, %17 : vector<1x256xi32>
    %c15_i32 = arith.constant 15 : i32
    %19 = vector.broadcast %c15_i32 : i32 to vector<1x256xi32>
    %20 = arith.cmpi slt, %16, %19 : vector<1x256xi32>
    %c0 = arith.constant 0 : index
    %c0_4 = arith.constant 0 : index
    %c0_5 = arith.constant 0 : index
    %21 = vector.load %arg1[%c0, %c0_4, %c0_5] : memref<1x8x256xbf16, #tpu.memory_space<vmem>>, vector<1x8x256xbf16>
    %22 = vector.shape_cast %21 : vector<1x8x256xbf16> to vector<8x256xbf16>
    %cst = arith.constant 0.000000e+00 : bf16
    %23 = vector.broadcast %cst : bf16 to vector<8x1xbf16>
    %24 = vector.extract_strided_slice %22 {offsets = [0, 0], sizes = [8, 255], strides = [1, 1]} : vector<8x256xbf16> to vector<8x255xbf16>
    %25 = tpu.concatenate %23, %24 in 1 : vector<8x1xbf16>, vector<8x255xbf16> -> vector<8x256xbf16>
    %cst_6 = arith.constant 0.000000e+00 : bf16
    %26 = vector.shape_cast %18 : vector<1x256xi1> to vector<1x256xi1>
    %27 = vector.broadcast %26 : vector<1x256xi1> to vector<8x256xi1>
    %28 = vector.broadcast %cst_6 : bf16 to vector<8x256xbf16>
    %29 = arith.select %27, %25, %28 : vector<8x256xi1>, vector<8x256xbf16>
    %cst_7 = arith.constant 0.000000e+00 : bf16
    %30 = vector.broadcast %cst_7 : bf16 to vector<8x1xbf16>
    %31 = vector.extract_strided_slice %22 {offsets = [0, 1], sizes = [8, 255], strides = [1, 1]} : vector<8x256xbf16> to vector<8x255xbf16>
    %32 = tpu.concatenate %31, %30 in 1 : vector<8x255xbf16>, vector<8x1xbf16> -> vector<8x256xbf16>
    %cst_8 = arith.constant 0.000000e+00 : bf16
    %33 = vector.shape_cast %20 : vector<1x256xi1> to vector<1x256xi1>
    %34 = vector.broadcast %33 : vector<1x256xi1> to vector<8x256xi1>
    %35 = vector.broadcast %cst_8 : bf16 to vector<8x256xbf16>
    %36 = arith.select %34, %32, %35 : vector<8x256xi1>, vector<8x256xbf16>
    %37 = tpu.concatenate %29, %22, %36 in 0 : vector<8x256xbf16>, vector<8x256xbf16>, vector<8x256xbf16> -> vector<24x256xbf16>
    %cst_9 = arith.constant 0.000000e+00 : bf16
    %38 = vector.broadcast %cst_9 : bf16 to vector<24x16xbf16>
    %39 = vector.extract_strided_slice %37 {offsets = [0, 0], sizes = [24, 240], strides = [1, 1]} : vector<24x256xbf16> to vector<24x240xbf16>
    %40 = tpu.concatenate %38, %39 in 1 : vector<24x16xbf16>, vector<24x240xbf16> -> vector<24x256xbf16>
    %c0_10 = arith.constant 0 : index
    %c0_11 = arith.constant 0 : index
    %c0_12 = arith.constant 0 : index
    %41 = vector.load %arg2[%c0_10, %c0_11, %c0_12] : memref<3x16x24xbf16, #tpu.memory_space<vmem>>, vector<1x16x24xbf16>
    %42 = vector.shape_cast %41 : vector<1x16x24xbf16> to vector<16x24xbf16>
    %cst_13 = arith.constant dense<0.000000e+00> : vector<16x256xf32>
    %43 = tpu.matmul %42, %40, %cst_13 {dimension_numbers = #tpu.dot_dimension_numbers<[1], [0], [0], [1], [0, 0, 1, 1], [], []>} : vector<16x24xbf16>, vector<24x256xbf16>, vector<16x256xf32> -> vector<16x256xf32>
    %c1 = arith.constant 1 : index
    %c0_14 = arith.constant 0 : index
    %c0_15 = arith.constant 0 : index
    %44 = vector.load %arg2[%c1, %c0_14, %c0_15] : memref<3x16x24xbf16, #tpu.memory_space<vmem>>, vector<1x16x24xbf16>
    %45 = vector.shape_cast %44 : vector<1x16x24xbf16> to vector<16x24xbf16>
    %cst_16 = arith.constant dense<0.000000e+00> : vector<16x256xf32>
    %46 = tpu.matmul %45, %37, %cst_16 {dimension_numbers = #tpu.dot_dimension_numbers<[1], [0], [0], [1], [0, 0, 1, 1], [], []>} : vector<16x24xbf16>, vector<24x256xbf16>, vector<16x256xf32> -> vector<16x256xf32>
    %47 = arith.addf %43, %46 : vector<16x256xf32>
    %cst_17 = arith.constant 0.000000e+00 : bf16
    %48 = vector.broadcast %cst_17 : bf16 to vector<24x16xbf16>
    %49 = vector.extract_strided_slice %37 {offsets = [0, 16], sizes = [24, 240], strides = [1, 1]} : vector<24x256xbf16> to vector<24x240xbf16>
    %50 = tpu.concatenate %49, %48 in 1 : vector<24x240xbf16>, vector<24x16xbf16> -> vector<24x256xbf16>
    %c2 = arith.constant 2 : index
    %c0_18 = arith.constant 0 : index
    %c0_19 = arith.constant 0 : index
    %51 = vector.load %arg2[%c2, %c0_18, %c0_19] : memref<3x16x24xbf16, #tpu.memory_space<vmem>>, vector<1x16x24xbf16>
    %52 = vector.shape_cast %51 : vector<1x16x24xbf16> to vector<16x24xbf16>
    %cst_20 = arith.constant dense<0.000000e+00> : vector<16x256xf32>
    %53 = tpu.matmul %52, %50, %cst_20 {dimension_numbers = #tpu.dot_dimension_numbers<[1], [0], [0], [1], [0, 0, 1, 1], [], []>} : vector<16x24xbf16>, vector<24x256xbf16>, vector<16x256xf32> -> vector<16x256xf32>
    %54 = arith.addf %47, %53 : vector<16x256xf32>
    %c0_21 = arith.constant 0 : index
    %c0_22 = arith.constant 0 : index
    %55 = vector.load %arg3[%c0_21, %c0_22] : memref<16x1xf32, #tpu.memory_space<vmem>>, vector<16x1xf32>
    %56 = vector.broadcast %55 : vector<16x1xf32> to vector<16x256xf32>
    %57 = arith.addf %54, %56 : vector<16x256xf32>
    %cst_23 = arith.constant 0.000000e+00 : f32
    %58 = vector.broadcast %cst_23 : f32 to vector<16x256xf32>
    %59 = arith.maximumf %57, %58 : vector<16x256xf32>
    %c0_24 = arith.constant 0 : index
    %c0_25 = arith.constant 0 : index
    %c0_26 = arith.constant 0 : index
    %60 = vector.load %arg8[%c0_24, %c0_25, %c0_26] : memref<1x16x256xf32, #tpu.memory_space<vmem>>, vector<1x16x256xf32>
    %61 = vector.shape_cast %60 : vector<1x16x256xf32> to vector<16x256xf32>
    %62 = vector.shape_cast %59 : vector<16x256xf32> to vector<1x16x256xf32>
    tpu.vector_store %arg8[%c0_24, %c0_25, %c0_26], %62 {strides = array<i32>} : memref<1x16x256xf32, #tpu.memory_space<vmem>>, vector<1x16x256xf32>,
    %63 = arith.truncf %59 : vector<16x256xf32> to vector<16x256xbf16>
    %cst_27 = arith.constant 0.000000e+00 : bf16
    %64 = vector.broadcast %cst_27 : bf16 to vector<16x1xbf16>
    %65 = vector.extract_strided_slice %63 {offsets = [0, 0], sizes = [16, 255], strides = [1, 1]} : vector<16x256xbf16> to vector<16x255xbf16>
    %66 = tpu.concatenate %64, %65 in 1 : vector<16x1xbf16>, vector<16x255xbf16> -> vector<16x256xbf16>
    %cst_28 = arith.constant 0.000000e+00 : bf16
    %67 = vector.shape_cast %18 : vector<1x256xi1> to vector<1x256xi1>
    %68 = vector.broadcast %67 : vector<1x256xi1> to vector<16x256xi1>
    %69 = vector.broadcast %cst_28 : bf16 to vector<16x256xbf16>
    %70 = arith.select %68, %66, %69 : vector<16x256xi1>, vector<16x256xbf16>
    %cst_29 = arith.constant 0.000000e+00 : bf16
    %71 = vector.broadcast %cst_29 : bf16 to vector<16x1xbf16>
    %72 = vector.extract_strided_slice %63 {offsets = [0, 1], sizes = [16, 255], strides = [1, 1]} : vector<16x256xbf16> to vector<16x255xbf16>
    %73 = tpu.concatenate %72, %71 in 1 : vector<16x255xbf16>, vector<16x1xbf16> -> vector<16x256xbf16>
    %cst_30 = arith.constant 0.000000e+00 : bf16
    %74 = vector.shape_cast %20 : vector<1x256xi1> to vector<1x256xi1>
    %75 = vector.broadcast %74 : vector<1x256xi1> to vector<16x256xi1>
    %76 = vector.broadcast %cst_30 : bf16 to vector<16x256xbf16>
    %77 = arith.select %75, %73, %76 : vector<16x256xi1>, vector<16x256xbf16>
    %78 = tpu.concatenate %70, %63, %77 in 0 : vector<16x256xbf16>, vector<16x256xbf16>, vector<16x256xbf16> -> vector<48x256xbf16>
    %cst_31 = arith.constant 0.000000e+00 : bf16
    %79 = vector.broadcast %cst_31 : bf16 to vector<48x16xbf16>
    %80 = vector.extract_strided_slice %78 {offsets = [0, 0], sizes = [48, 240], strides = [1, 1]} : vector<48x256xbf16> to vector<48x240xbf16>
    %81 = tpu.concatenate %79, %80 in 1 : vector<48x16xbf16>, vector<48x240xbf16> -> vector<48x256xbf16>
    %c0_32 = arith.constant 0 : index
    %c0_33 = arith.constant 0 : index
    %c0_34 = arith.constant 0 : index
    %82 = vector.load %arg4[%c0_32, %c0_33, %c0_34] : memref<3x32x48xbf16, #tpu.memory_space<vmem>>, vector<1x32x48xbf16>
    %83 = vector.shape_cast %82 : vector<1x32x48xbf16> to vector<32x48xbf16>
    %cst_35 = arith.constant dense<0.000000e+00> : vector<32x256xf32>
    %84 = tpu.matmul %83, %81, %cst_35 {dimension_numbers = #tpu.dot_dimension_numbers<[1], [0], [0], [1], [0, 0, 1, 1], [], []>} : vector<32x48xbf16>, vector<48x256xbf16>, vector<32x256xf32> -> vector<32x256xf32>
    %c1_36 = arith.constant 1 : index
    %c0_37 = arith.constant 0 : index
    %c0_38 = arith.constant 0 : index
    %85 = vector.load %arg4[%c1_36, %c0_37, %c0_38] : memref<3x32x48xbf16, #tpu.memory_space<vmem>>, vector<1x32x48xbf16>
    %86 = vector.shape_cast %85 : vector<1x32x48xbf16> to vector<32x48xbf16>
    %cst_39 = arith.constant dense<0.000000e+00> : vector<32x256xf32>
    %87 = tpu.matmul %86, %78, %cst_39 {dimension_numbers = #tpu.dot_dimension_numbers<[1], [0], [0], [1], [0, 0, 1, 1], [], []>} : vector<32x48xbf16>, vector<48x256xbf16>, vector<32x256xf32> -> vector<32x256xf32>
    %88 = arith.addf %84, %87 : vector<32x256xf32>
    %cst_40 = arith.constant 0.000000e+00 : bf16
    %89 = vector.broadcast %cst_40 : bf16 to vector<48x16xbf16>
    %90 = vector.extract_strided_slice %78 {offsets = [0, 16], sizes = [48, 240], strides = [1, 1]} : vector<48x256xbf16> to vector<48x240xbf16>
    %91 = tpu.concatenate %90, %89 in 1 : vector<48x240xbf16>, vector<48x16xbf16> -> vector<48x256xbf16>
    %c2_41 = arith.constant 2 : index
    %c0_42 = arith.constant 0 : index
    %c0_43 = arith.constant 0 : index
    %92 = vector.load %arg4[%c2_41, %c0_42, %c0_43] : memref<3x32x48xbf16, #tpu.memory_space<vmem>>, vector<1x32x48xbf16>
    %93 = vector.shape_cast %92 : vector<1x32x48xbf16> to vector<32x48xbf16>
    %cst_44 = arith.constant dense<0.000000e+00> : vector<32x256xf32>
    %94 = tpu.matmul %93, %91, %cst_44 {dimension_numbers = #tpu.dot_dimension_numbers<[1], [0], [0], [1], [0, 0, 1, 1], [], []>} : vector<32x48xbf16>, vector<48x256xbf16>, vector<32x256xf32> -> vector<32x256xf32>
    %95 = arith.addf %88, %94 : vector<32x256xf32>
    %c0_45 = arith.constant 0 : index
    %c0_46 = arith.constant 0 : index
    %96 = vector.load %arg5[%c0_45, %c0_46] : memref<32x1xf32, #tpu.memory_space<vmem>>, vector<32x1xf32>
    %97 = vector.broadcast %96 : vector<32x1xf32> to vector<32x256xf32>
    %98 = arith.addf %95, %97 : vector<32x256xf32>
    %cst_47 = arith.constant 0.000000e+00 : f32
    %99 = vector.broadcast %cst_47 : f32 to vector<32x256xf32>
    %100 = arith.maximumf %98, %99 : vector<32x256xf32>
    %c0_48 = arith.constant 0 : index
    %c0_49 = arith.constant 0 : index
    %c0_50 = arith.constant 0 : index
    %101 = vector.load %arg9[%c0_48, %c0_49, %c0_50] : memref<1x32x256xf32, #tpu.memory_space<vmem>>, vector<1x32x256xf32>
    %102 = vector.shape_cast %101 : vector<1x32x256xf32> to vector<32x256xf32>
    %103 = vector.shape_cast %100 : vector<32x256xf32> to vector<1x32x256xf32>
    tpu.vector_store %arg9[%c0_48, %c0_49, %c0_50], %103 {strides = array<i32>} : memref<1x32x256xf32, #tpu.memory_space<vmem>>, vector<1x32x256xf32>,
    %104 = arith.truncf %100 : vector<32x256xf32> to vector<32x256xbf16>
    %cst_51 = arith.constant 0.000000e+00 : bf16
    %105 = vector.broadcast %cst_51 : bf16 to vector<32x1xbf16>
    %106 = vector.extract_strided_slice %104 {offsets = [0, 0], sizes = [32, 255], strides = [1, 1]} : vector<32x256xbf16> to vector<32x255xbf16>
    %107 = tpu.concatenate %105, %106 in 1 : vector<32x1xbf16>, vector<32x255xbf16> -> vector<32x256xbf16>
    %cst_52 = arith.constant 0.000000e+00 : bf16
    %108 = vector.shape_cast %18 : vector<1x256xi1> to vector<1x256xi1>
    %109 = vector.broadcast %108 : vector<1x256xi1> to vector<32x256xi1>
    %110 = vector.broadcast %cst_52 : bf16 to vector<32x256xbf16>
    %111 = arith.select %109, %107, %110 : vector<32x256xi1>, vector<32x256xbf16>
    %cst_53 = arith.constant 0.000000e+00 : bf16
    %112 = vector.broadcast %cst_53 : bf16 to vector<32x1xbf16>
    %113 = vector.extract_strided_slice %104 {offsets = [0, 1], sizes = [32, 255], strides = [1, 1]} : vector<32x256xbf16> to vector<32x255xbf16>
    %114 = tpu.concatenate %113, %112 in 1 : vector<32x255xbf16>, vector<32x1xbf16> -> vector<32x256xbf16>
    %cst_54 = arith.constant 0.000000e+00 : bf16
    %115 = vector.shape_cast %20 : vector<1x256xi1> to vector<1x256xi1>
    %116 = vector.broadcast %115 : vector<1x256xi1> to vector<32x256xi1>
    %117 = vector.broadcast %cst_54 : bf16 to vector<32x256xbf16>
    %118 = arith.select %116, %114, %117 : vector<32x256xi1>, vector<32x256xbf16>
    %119 = tpu.concatenate %111, %104, %118 in 0 : vector<32x256xbf16>, vector<32x256xbf16>, vector<32x256xbf16> -> vector<96x256xbf16>
    %cst_55 = arith.constant 0.000000e+00 : bf16
    %120 = vector.broadcast %cst_55 : bf16 to vector<96x16xbf16>
    %121 = vector.extract_strided_slice %119 {offsets = [0, 0], sizes = [96, 240], strides = [1, 1]} : vector<96x256xbf16> to vector<96x240xbf16>
    %122 = tpu.concatenate %120, %121 in 1 : vector<96x16xbf16>, vector<96x240xbf16> -> vector<96x256xbf16>
    %c0_56 = arith.constant 0 : index
    %c0_57 = arith.constant 0 : index
    %c0_58 = arith.constant 0 : index
    %123 = vector.load %arg6[%c0_56, %c0_57, %c0_58] : memref<3x8x96xbf16, #tpu.memory_space<vmem>>, vector<1x8x96xbf16>
    %124 = vector.shape_cast %123 : vector<1x8x96xbf16> to vector<8x96xbf16>
    %cst_59 = arith.constant dense<0.000000e+00> : vector<8x256xf32>
    %125 = tpu.matmul %124, %122, %cst_59 {dimension_numbers = #tpu.dot_dimension_numbers<[1], [0], [0], [1], [0, 0, 1, 1], [], []>} : vector<8x96xbf16>, vector<96x256xbf16>, vector<8x256xf32> -> vector<8x256xf32>
    %c1_60 = arith.constant 1 : index
    %c0_61 = arith.constant 0 : index
    %c0_62 = arith.constant 0 : index
    %126 = vector.load %arg6[%c1_60, %c0_61, %c0_62] : memref<3x8x96xbf16, #tpu.memory_space<vmem>>, vector<1x8x96xbf16>
    %127 = vector.shape_cast %126 : vector<1x8x96xbf16> to vector<8x96xbf16>
    %cst_63 = arith.constant dense<0.000000e+00> : vector<8x256xf32>
    %128 = tpu.matmul %127, %119, %cst_63 {dimension_numbers = #tpu.dot_dimension_numbers<[1], [0], [0], [1], [0, 0, 1, 1], [], []>} : vector<8x96xbf16>, vector<96x256xbf16>, vector<8x256xf32> -> vector<8x256xf32>
    %129 = arith.addf %125, %128 : vector<8x256xf32>
    %cst_64 = arith.constant 0.000000e+00 : bf16
    %130 = vector.broadcast %cst_64 : bf16 to vector<96x16xbf16>
    %131 = vector.extract_strided_slice %119 {offsets = [0, 16], sizes = [96, 240], strides = [1, 1]} : vector<96x256xbf16> to vector<96x240xbf16>
    %132 = tpu.concatenate %131, %130 in 1 : vector<96x240xbf16>, vector<96x16xbf16> -> vector<96x256xbf16>
    %c2_65 = arith.constant 2 : index
    %c0_66 = arith.constant 0 : index
    %c0_67 = arith.constant 0 : index
    %133 = vector.load %arg6[%c2_65, %c0_66, %c0_67] : memref<3x8x96xbf16, #tpu.memory_space<vmem>>, vector<1x8x96xbf16>
    %134 = vector.shape_cast %133 : vector<1x8x96xbf16> to vector<8x96xbf16>
    %cst_68 = arith.constant dense<0.000000e+00> : vector<8x256xf32>
    %135 = tpu.matmul %134, %132, %cst_68 {dimension_numbers = #tpu.dot_dimension_numbers<[1], [0], [0], [1], [0, 0, 1, 1], [], []>} : vector<8x96xbf16>, vector<96x256xbf16>, vector<8x256xf32> -> vector<8x256xf32>
    %136 = arith.addf %129, %135 : vector<8x256xf32>
    %c0_69 = arith.constant 0 : index
    %c0_70 = arith.constant 0 : index
    %137 = vector.load %arg7[%c0_69, %c0_70] : memref<8x1xf32, #tpu.memory_space<vmem>>, vector<8x1xf32>
    %138 = vector.broadcast %137 : vector<8x1xf32> to vector<8x256xf32>
    %139 = arith.addf %136, %138 : vector<8x256xf32>
    %cst_71 = arith.constant 0.000000e+00 : f32
    %140 = vector.broadcast %cst_71 : f32 to vector<8x256xf32>
    %141 = arith.maximumf %139, %140 : vector<8x256xf32>
    %142 = vector.extract_strided_slice %141 {offsets = [0, 0], sizes = [2, 256], strides = [1, 1]} : vector<8x256xf32> to vector<2x256xf32>
    %c0_72 = arith.constant 0 : index
    %c0_73 = arith.constant 0 : index
    %c0_74 = arith.constant 0 : index
    %143 = vector.load %arg10[%c0_72, %c0_73, %c0_74] : memref<1x2x256xf32, #tpu.memory_space<vmem>>, vector<1x2x256xf32>
    %144 = vector.shape_cast %143 : vector<1x2x256xf32> to vector<2x256xf32>
    %145 = vector.shape_cast %142 : vector<2x256xf32> to vector<1x2x256xf32>
    tpu.vector_store %arg10[%c0_72, %c0_73, %c0_74], %145 {strides = array<i32>} : memref<1x2x256xf32, #tpu.memory_space<vmem>>, vector<1x2x256xf32>,
    return
  }
  func.func @transform_0(%arg0: i32) -> (i32, i32, i32) {
    %c0_i32 = arith.constant 0 : i32
    %c0_i32_0 = arith.constant 0 : i32
    %c0_i32_1 = arith.constant 0 : i32
    return %arg0, %c0_i32, %c0_i32_0 : i32, i32, i32
  }
  func.func @transform_1(%arg0: i32) -> (i32, i32, i32) {
    %c0_i32 = arith.constant 0 : i32
    %c0_i32_0 = arith.constant 0 : i32
    %c0_i32_1 = arith.constant 0 : i32
    %c0_i32_2 = arith.constant 0 : i32
    return %c0_i32, %c0_i32_0, %c0_i32_1 : i32, i32, i32
  }
  func.func @transform_2(%arg0: i32) -> (i32, i32) {
    %c0_i32 = arith.constant 0 : i32
    %c0_i32_0 = arith.constant 0 : i32
    %c0_i32_1 = arith.constant 0 : i32
    return %c0_i32, %c0_i32_0 : i32, i32
  }
  func.func @transform_3(%arg0: i32) -> (i32, i32, i32) {
    %c0_i32 = arith.constant 0 : i32
    %c0_i32_0 = arith.constant 0 : i32
    %c0_i32_1 = arith.constant 0 : i32
    %c0_i32_2 = arith.constant 0 : i32
    return %c0_i32, %c0_i32_0, %c0_i32_1 : i32, i32, i32
  }
  func.func @transform_4(%arg0: i32) -> (i32, i32) {
    %c0_i32 = arith.constant 0 : i32
    %c0_i32_0 = arith.constant 0 : i32
    %c0_i32_1 = arith.constant 0 : i32
    return %c0_i32, %c0_i32_0 : i32, i32
  }
  func.func @transform_5(%arg0: i32) -> (i32, i32, i32) {
    %c0_i32 = arith.constant 0 : i32
    %c0_i32_0 = arith.constant 0 : i32
    %c0_i32_1 = arith.constant 0 : i32
    %c0_i32_2 = arith.constant 0 : i32
    return %c0_i32, %c0_i32_0, %c0_i32_1 : i32, i32, i32
  }
  func.func @transform_6(%arg0: i32) -> (i32, i32) {
    %c0_i32 = arith.constant 0 : i32
    %c0_i32_0 = arith.constant 0 : i32
    %c0_i32_1 = arith.constant 0 : i32
    return %c0_i32, %c0_i32_0 : i32, i32
  }
  func.func @transform_7(%arg0: i32) -> (i32, i32, i32) {
    %c0_i32 = arith.constant 0 : i32
    %c0_i32_0 = arith.constant 0 : i32
    %c0_i32_1 = arith.constant 0 : i32
    return %arg0, %c0_i32, %c0_i32_0 : i32, i32, i32
  }
  func.func @transform_8(%arg0: i32) -> (i32, i32, i32) {
    %c0_i32 = arith.constant 0 : i32
    %c0_i32_0 = arith.constant 0 : i32
    %c0_i32_1 = arith.constant 0 : i32
    return %arg0, %c0_i32, %c0_i32_0 : i32, i32, i32
  }
  func.func @transform_9(%arg0: i32) -> (i32, i32, i32) {
    %c0_i32 = arith.constant 0 : i32
    %c0_i32_0 = arith.constant 0 : i32
    %c0_i32_1 = arith.constant 0 : i32
    return %arg0, %c0_i32, %c0_i32_0 : i32, i32, i32
  }
}

</mosaic_0001>

<llo_original>
// kernel: edge_feature_extractor.1
$region0: #{edge_feature_extractor.1}
  #allocation0 [shape = 'u32[]', space=smem, size = 0x4, offset = 0x4, fixed_abs, tag = 'smem constant byte address 0x4 - core index']
  #allocation1 [shape = 'u32[144,128]{1,0:T(1,128)}', space=vmem, size = 0x12000, scoped, tag = 'internal scratch']
  %s0 = inlined_call_operand.vmem [shape: bf16[2,8,256], index: 0, kind: input, shape index: {}]
  %s1 = inlined_call_operand.vmem [shape: bf16[3,16,24], index: 1, kind: input, shape index: {}]
  %s2 = inlined_call_operand.vmem [shape: f32[16,1], index: 2, kind: input, shape index: {}]
  %s3 = inlined_call_operand.vmem [shape: bf16[3,32,48], index: 3, kind: input, shape index: {}]
  %s4 = inlined_call_operand.vmem [shape: f32[32,1], index: 4, kind: input, shape index: {}]
  %s5 = inlined_call_operand.vmem [shape: bf16[3,8,96], index: 5, kind: input, shape index: {}]
  %s6 = inlined_call_operand.vmem [shape: f32[8,1], index: 6, kind: input, shape index: {}]
  %s7 = inlined_call_operand.vmem [shape: f32[2,16,256], index: 7, kind: output, shape index: {0}]
  %s8 = inlined_call_operand.vmem [shape: f32[2,32,256], index: 8, kind: output, shape index: {1}]
  %s9 = inlined_call_operand.vmem [shape: f32[2,2,256], index: 9, kind: output, shape index: {2}]
  %10 = xla_tuple %s7, %s8, %s9
  %s11 = sld [smem:[#allocation0]]
  $region77: #{edge_feature_extractor.1} parent=0
    _
  %s13 = ssub.s32 1, %s11
  %s14 = scalar_select 0, %s13, %s11
  loop: start=0, step=1, limit=4
  $region2: #{edge_feature_extractor.1} parent=0 // loop_pre_header
    _
  $region3: #{edge_feature_extractor.1} parent=0 // loop_header
    %s16 = sphi 0, %s20
    %p17 = scmp.ge.s32.totalorder %s16, 4
    %s26 = sphi 0, %s28
    %s29 = sphi 0, %s26
    %s30 = sphi 0, %s29
    %s46 = sphi 0, %s30
    %s50 = sphi 0, %s50
    %s52 = sphi 0, %s50
    %s53 = sphi 0, %s52
    %s67 = sphi 0, %s53
    %s71 = sphi 0, %s71
    %s73 = sphi 0, %s71
    %s74 = sphi 0, %s73
    %s88 = sphi 0, %s74
    %s92 = sphi 0, %s92
    %s94 = sphi 0, %s92
    %s95 = sphi 0, %s94
    %s109 = sphi 0, %s95
    %s113 = sphi 0, %s113
    %s115 = sphi 0, %s113
    %s116 = sphi 0, %s115
    %s130 = sphi 0, %s116
    %s134 = sphi 0, %s134
    %s136 = sphi 0, %s134
    %s137 = sphi 0, %s136
    %s151 = sphi 0, %s137
    %s155 = sphi 0, %s155
    %s157 = sphi 0, %s155
    %s158 = sphi 0, %s157
    %s172 = sphi 0, %s158
    %s178 = sphi 0, %s180
    %s181 = sphi 0, %s178
    %s182 = sphi 0, %s181
    %s198 = sphi 0, %s182
    %s204 = sphi 0, %s206
    %s207 = sphi 0, %s204
    %s208 = sphi 0, %s207
    %s224 = sphi 0, %s208
    %s230 = sphi 0, %s232
    %s233 = sphi 0, %s230
    %s234 = sphi 0, %s233
    %s250 = sphi 0, %s234
  $region4: #{edge_feature_extractor.1} parent=0 // loop_header_branch
    %19 = sbr.rel (%p17) target = $region8
  $region5: #{edge_feature_extractor.1} parent=0 // loop_body
    %s21 = ssub.s32 %s16, 1
    %s22 = ssub.s32 %s16, 2
    %s23 = sadd.s32 %s16, 1
    %s24 = ssub.s32 %s16, %s23
    %p25 = scmp.eq.s32.totalorder %s24, 0
    %s27 = sadd.s32 %s26, 1
    %s28 = scalar_select %p25, %s26, %s27
    %p31 = pneg %p25
    %p32 = scmp.eq.s32.totalorder %s16, 1
    %p33 = por %p31, %p32
    %p34 = scmp.ne.s32.totalorder %s26, %s29
    %p35 = scmp.eq.s32.totalorder %s16, 0
    %p36 = por %p34, %p35
    %p37 = scmp.ne.s32.totalorder %s26, %s29
    %p38 = scmp.eq.s32.totalorder %s21, 1
    %p39 = por %p37, %p38
    %p40 = scmp.ne.s32.totalorder %s29, %s30
    %p41 = scmp.eq.s32.totalorder %s21, 0
    %p42 = por %p40, %p41
    %p43 = scmp.ne.s32.totalorder %s29, %s30
    %p44 = scmp.eq.s32.totalorder %s22, 1
    %p45 = por %p43, %p44
    %p47 = scmp.ne.s32.totalorder %s30, %s46
    %p48 = scmp.eq.s32.totalorder %s22, 0
    %p49 = por %p47, %p48
    %s51 = sadd.s32 %s50, 1
    %p54 = scmp.eq.s32.totalorder %s16, 1
    %p55 = scmp.ne.s32.totalorder %s50, %s52
    %p56 = scmp.eq.s32.totalorder %s16, 0
    %p57 = por %p55, %p56
    %p58 = scmp.ne.s32.totalorder %s50, %s52
    %p59 = scmp.eq.s32.totalorder %s21, 1
    %p60 = por %p58, %p59
    %p61 = scmp.ne.s32.totalorder %s52, %s53
    %p62 = scmp.eq.s32.totalorder %s21, 0
    %p63 = por %p61, %p62
    %p64 = scmp.ne.s32.totalorder %s52, %s53
    %p65 = scmp.eq.s32.totalorder %s22, 1
    %p66 = por %p64, %p65
    %p68 = scmp.ne.s32.totalorder %s53, %s67
    %p69 = scmp.eq.s32.totalorder %s22, 0
    %p70 = por %p68, %p69
    %s72 = sadd.s32 %s71, 1
    %p75 = scmp.eq.s32.totalorder %s16, 1
    %p76 = scmp.ne.s32.totalorder %s71, %s73
    %p77 = scmp.eq.s32.totalorder %s16, 0
    %p78 = por %p76, %p77
    %p79 = scmp.ne.s32.totalorder %s71, %s73
    %p80 = scmp.eq.s32.totalorder %s21, 1
    %p81 = por %p79, %p80
    %p82 = scmp.ne.s32.totalorder %s73, %s74
    %p83 = scmp.eq.s32.totalorder %s21, 0
    %p84 = por %p82, %p83
    %p85 = scmp.ne.s32.totalorder %s73, %s74
    %p86 = scmp.eq.s32.totalorder %s22, 1
    %p87 = por %p85, %p86
    %p89 = scmp.ne.s32.totalorder %s74, %s88
    %p90 = scmp.eq.s32.totalorder %s22, 0
    %p91 = por %p89, %p90
    %s93 = sadd.s32 %s92, 1
    %p96 = scmp.eq.s32.totalorder %s16, 1
    %p97 = scmp.ne.s32.totalorder %s92, %s94
    %p98 = scmp.eq.s32.totalorder %s16, 0
    %p99 = por %p97, %p98
    %p100 = scmp.ne.s32.totalorder %s92, %s94
    %p101 = scmp.eq.s32.totalorder %s21, 1
    %p102 = por %p100, %p101
    %p103 = scmp.ne.s32.totalorder %s94, %s95
    %p104 = scmp.eq.s32.totalorder %s21, 0
    %p105 = por %p103, %p104
    %p106 = scmp.ne.s32.totalorder %s94, %s95
    %p107 = scmp.eq.s32.totalorder %s22, 1
    %p108 = por %p106, %p107
    %p110 = scmp.ne.s32.totalorder %s95, %s109
    %p111 = scmp.eq.s32.totalorder %s22, 0
    %p112 = por %p110, %p111
    %s114 = sadd.s32 %s113, 1
    %p117 = scmp.eq.s32.totalorder %s16, 1
    %p118 = scmp.ne.s32.totalorder %s113, %s115
    %p119 = scmp.eq.s32.totalorder %s16, 0
    %p120 = por %p118, %p119
    %p121 = scmp.ne.s32.totalorder %s113, %s115
    %p122 = scmp.eq.s32.totalorder %s21, 1
    %p123 = por %p121, %p122
    %p124 = scmp.ne.s32.totalorder %s115, %s116
    %p125 = scmp.eq.s32.totalorder %s21, 0
    %p126 = por %p124, %p125
    %p127 = scmp.ne.s32.totalorder %s115, %s116
    %p128 = scmp.eq.s32.totalorder %s22, 1
    %p129 = por %p127, %p128
    %p131 = scmp.ne.s32.totalorder %s116, %s130
    %p132 = scmp.eq.s32.totalorder %s22, 0
    %p133 = por %p131, %p132
    %s135 = sadd.s32 %s134, 1
    %p138 = scmp.eq.s32.totalorder %s16, 1
    %p139 = scmp.ne.s32.totalorder %s134, %s136
    %p140 = scmp.eq.s32.totalorder %s16, 0
    %p141 = por %p139, %p140
    %p142 = scmp.ne.s32.totalorder %s134, %s136
    %p143 = scmp.eq.s32.totalorder %s21, 1
    %p144 = por %p142, %p143
    %p145 = scmp.ne.s32.totalorder %s136, %s137
    %p146 = scmp.eq.s32.totalorder %s21, 0
    %p147 = por %p145, %p146
    %p148 = scmp.ne.s32.totalorder %s136, %s137
    %p149 = scmp.eq.s32.totalorder %s22, 1
    %p150 = por %p148, %p149
    %p152 = scmp.ne.s32.totalorder %s137, %s151
    %p153 = scmp.eq.s32.totalorder %s22, 0
    %p154 = por %p152, %p153
    %s156 = sadd.s32 %s155, 1
    %p159 = scmp.eq.s32.totalorder %s16, 1
    %p160 = scmp.ne.s32.totalorder %s155, %s157
    %p161 = scmp.eq.s32.totalorder %s16, 0
    %p162 = por %p160, %p161
    %p163 = scmp.ne.s32.totalorder %s155, %s157
    %p164 = scmp.eq.s32.totalorder %s21, 1
    %p165 = por %p163, %p164
    %p166 = scmp.ne.s32.totalorder %s157, %s158
    %p167 = scmp.eq.s32.totalorder %s21, 0
    %p168 = por %p166, %p167
    %p169 = scmp.ne.s32.totalorder %s157, %s158
    %p170 = scmp.eq.s32.totalorder %s22, 1
    %p171 = por %p169, %p170
    %p173 = scmp.ne.s32.totalorder %s158, %s172
    %p174 = scmp.eq.s32.totalorder %s22, 0
    %p175 = por %p173, %p174
    %s176 = ssub.s32 %s16, %s23
    %p177 = scmp.eq.s32.totalorder %s176, 0
    %s179 = sadd.s32 %s178, 1
    %s180 = scalar_select %p177, %s178, %s179
    %p183 = pneg %p177
    %p184 = scmp.eq.s32.totalorder %s16, 1
    %p185 = por %p183, %p184
    %p186 = scmp.ne.s32.totalorder %s178, %s181
    %p187 = scmp.eq.s32.totalorder %s16, 0
    %p188 = por %p186, %p187
    %p189 = scmp.ne.s32.totalorder %s178, %s181
    %p190 = scmp.eq.s32.totalorder %s21, 1
    %p191 = por %p189, %p190
    %p192 = scmp.ne.s32.totalorder %s181, %s182
    %p193 = scmp.eq.s32.totalorder %s21, 0
    %p194 = por %p192, %p193
    %p195 = scmp.ne.s32.totalorder %s181, %s182
    %p196 = scmp.eq.s32.totalorder %s22, 1
    %p197 = por %p195, %p196
    %p199 = scmp.ne.s32.totalorder %s182, %s198
    %p200 = scmp.eq.s32.totalorder %s22, 0
    %p201 = por %p199, %p200
    %s202 = ssub.s32 %s16, %s23
    %p203 = scmp.eq.s32.totalorder %s202, 0
    %s205 = sadd.s32 %s204, 1
    %s206 = scalar_select %p203, %s204, %s205
    %p209 = pneg %p203
    %p210 = scmp.eq.s32.totalorder %s16, 1
    %p211 = por %p209, %p210
    %p212 = scmp.ne.s32.totalorder %s204, %s207
    %p213 = scmp.eq.s32.totalorder %s16, 0
    %p214 = por %p212, %p213
    %p215 = scmp.ne.s32.totalorder %s204, %s207
    %p216 = scmp.eq.s32.totalorder %s21, 1
    %p217 = por %p215, %p216
    %p218 = scmp.ne.s32.totalorder %s207, %s208
    %p219 = scmp.eq.s32.totalorder %s21, 0
    %p220 = por %p218, %p219
    %p221 = scmp.ne.s32.totalorder %s207, %s208
    %p222 = scmp.eq.s32.totalorder %s22, 1
    %p223 = por %p221, %p222
    %p225 = scmp.ne.s32.totalorder %s208, %s224
    %p226 = scmp.eq.s32.totalorder %s22, 0
    %p227 = por %p225, %p226
    %s228 = ssub.s32 %s16, %s23
    %p229 = scmp.eq.s32.totalorder %s228, 0
    %s231 = sadd.s32 %s230, 1
    %s232 = scalar_select %p229, %s230, %s231
    %p235 = pneg %p229
    %p236 = scmp.eq.s32.totalorder %s16, 1
    %p237 = por %p235, %p236
    %p238 = scmp.ne.s32.totalorder %s230, %s233
    %p239 = scmp.eq.s32.totalorder %s16, 0
    %p240 = por %p238, %p239
    %p241 = scmp.ne.s32.totalorder %s230, %s233
    %p242 = scmp.eq.s32.totalorder %s21, 1
    %p243 = por %p241, %p242
    %p244 = scmp.ne.s32.totalorder %s233, %s234
    %p245 = scmp.eq.s32.totalorder %s21, 0
    %p246 = por %p244, %p245
    %p247 = scmp.ne.s32.totalorder %s233, %s234
    %p248 = scmp.eq.s32.totalorder %s22, 1
    %p249 = por %p247, %p248
    %p251 = scmp.ne.s32.totalorder %s234, %s250
    %p252 = scmp.eq.s32.totalorder %s22, 0
    %p253 = por %p251, %p252
    %p254 = scmp.le.s32.totalorder 1, %s16
    %p255 = scmp.lt.s32.totalorder %s16, 3
    %p256 = pnand %p254, %p255
    %p257 = pneg %p256
    // Predicated region
    $region9: #{edge_feature_extractor.1} parent=5 // pred_check
      _
    $region10: #{edge_feature_extractor.1} parent=5 // pred_check_branch
      %259 = sbr.rel (%p256) target = $region12
    $region11: #{edge_feature_extractor.1} parent=5 // pred_region
      %s260 = ssub.s32 %s16, 1
      // Predicated region
      $region13: #{edge_feature_extractor.1} parent=11 // pred_check
        %p261 = pneg %p63
      $region14: #{edge_feature_extractor.1} parent=11 // pred_check_branch
        %263 = sbr.rel (%p261) target = $region16
      $region15: #{edge_feature_extractor.1} parent=11 // pred_region
        _
      $region16: #{edge_feature_extractor.1} parent=11 // pred_fallthru
        _
      // Predicated region
      $region17: #{edge_feature_extractor.1} parent=11 // pred_check
        %p264 = pneg %p84
      $region18: #{edge_feature_extractor.1} parent=11 // pred_check_branch
        %266 = sbr.rel (%p264) target = $region20
      $region19: #{edge_feature_extractor.1} parent=11 // pred_region
        _
      $region20: #{edge_feature_extractor.1} parent=11 // pred_fallthru
        _
      // Predicated region
      $region21: #{edge_feature_extractor.1} parent=11 // pred_check
        %p267 = pneg %p105
      $region22: #{edge_feature_extractor.1} parent=11 // pred_check_branch
        %269 = sbr.rel (%p267) target = $region24
      $region23: #{edge_feature_extractor.1} parent=11 // pred_region
        _
      $region24: #{edge_feature_extractor.1} parent=11 // pred_fallthru
        _
      // Predicated region
      $region25: #{edge_feature_extractor.1} parent=11 // pred_check
        %p270 = pneg %p126
      $region26: #{edge_feature_extractor.1} parent=11 // pred_check_branch
        %272 = sbr.rel (%p270) target = $region28
      $region27: #{edge_feature_extractor.1} parent=11 // pred_region
        _
      $region28: #{edge_feature_extractor.1} parent=11 // pred_fallthru
        _
      // Predicated region
      $region29: #{edge_feature_extractor.1} parent=11 // pred_check
        %p273 = pneg %p147
      $region30: #{edge_feature_extractor.1} parent=11 // pred_check_branch
        %275 = sbr.rel (%p273) target = $region32
      $region31: #{edge_feature_extractor.1} parent=11 // pred_region
        _
      $region32: #{edge_feature_extractor.1} parent=11 // pred_fallthru
        _
      // Predicated region
      $region33: #{edge_feature_extractor.1} parent=11 // pred_check
        %p276 = pneg %p168
      $region34: #{edge_feature_extractor.1} parent=11 // pred_check_branch
        %278 = sbr.rel (%p276) target = $region36
      $region35: #{edge_feature_extractor.1} parent=11 // pred_region
        _
      $region36: #{edge_feature_extractor.1} parent=11 // pred_fallthru
        _
    $region12: #{edge_feature_extractor.1} parent=5 // pred_fallthru
      _
    %p279 = scmp.lt.s32.totalorder %s16, 2
    // Predicated region
    $region37: #{edge_feature_extractor.1} parent=5 // pred_check
      %p280 = pneg %p279
    $region38: #{edge_feature_extractor.1} parent=5 // pred_check_branch
      %282 = sbr.rel (%p280) target = $region40
    $region39: #{edge_feature_extractor.1} parent=5 // pred_region
      // Predicated region
      $region41: #{edge_feature_extractor.1} parent=39 // pred_check
        %p283 = pneg %p36
      $region42: #{edge_feature_extractor.1} parent=39 // pred_check_branch
        %285 = sbr.rel (%p283) target = $region44
      $region43: #{edge_feature_extractor.1} parent=39 // pred_region
        %p286 = scmp.lt.s32.totalorder %s16, 1
        %s287 = scalar_select %p286, %s16, 1
        %s288 = smul.addr %s287, 2
        %s289 = smul.addr %s288, 4
        %s290 = scalar_lea.vmem %s0, %s289
      $region44: #{edge_feature_extractor.1} parent=39 // pred_fallthru
        _
    $region40: #{edge_feature_extractor.1} parent=5 // pred_fallthru
      _
    %p291 = scmp.le.s32.totalorder 1, %s16
    %p292 = scmp.lt.s32.totalorder %s16, 3
    %p293 = pnand %p291, %p292
    %p294 = pneg %p293
    // Predicated region
    $region45: #{edge_feature_extractor.1} parent=5 // pred_check
      _
    $region46: #{edge_feature_extractor.1} parent=5 // pred_check_branch
      %296 = sbr.rel (%p293) target = $region48
    $region47: #{edge_feature_extractor.1} parent=5 // pred_region
      %s297 = ssub.s32 %s16, 1
      %p298 = scmp.lt.s32.totalorder %s21, 1
      %s299 = scalar_select %p298, %s21, 1
      %s300 = smul.addr %s299, 2
      %s301 = smul.addr %s300, 4
      %s302 = scalar_lea.vmem %s0, %s301
      %p303 = pneg %p42
      %p304 = pneg %p39
      %p305 = pneg %p63
      %p306 = pneg %p60
      %p307 = pneg %p84
      %p308 = pneg %p81
      %p309 = pneg %p105
      %p310 = pneg %p102
      %p311 = pneg %p126
      %p312 = pneg %p123
      %p313 = pneg %p147
      %p314 = pneg %p144
      %p315 = pneg %p168
      %p316 = pneg %p165
      %p317 = pneg %p194
      %p318 = pneg %p191
      %p319 = scmp.lt.s32.totalorder %s21, 1
      %s320 = scalar_select %p319, %s21, 1
      %s321 = smul.addr %s320, 4
      %s322 = smul.addr %s321, 8
      %s323 = scalar_lea.vmem %s7, %s322
      %p324 = pneg %p220
      %p325 = pneg %p217
      %p326 = scmp.lt.s32.totalorder %s21, 1
      %s327 = scalar_select %p326, %s21, 1
      %s328 = smul.addr %s327, 8
      %s329 = smul.addr %s328, 8
      %s330 = scalar_lea.vmem %s8, %s329
      %p331 = pneg %p246
      %p332 = pneg %p243
      %p333 = scmp.lt.s32.totalorder %s21, 1
      %s334 = scalar_select %p333, %s21, 1
      %s335 = smul.addr %s334, 2
      %s336 = smul.addr %s335, 2
      %s337 = scalar_lea.vmem %s9, %s336
      %p338 = scmp.lt.s32.totalorder %s21, 1
      %s339 = scalar_select %p338, %s21, 1
      %s340 = smul.addr %s339, 2
      %s341 = smul.addr %s340, 4
      %s342 = scalar_lea.vmem %s0, %s341
      %p343 = scmp.lt.s32.totalorder %s21, 1
      %s344 = scalar_select %p343, %s21, 1
      %s345 = smul.addr %s344, 4
      %s346 = smul.addr %s345, 8
      %s347 = scalar_lea.vmem %s7, %s346
      %p348 = scmp.lt.s32.totalorder %s21, 1
      %s349 = scalar_select %p348, %s21, 1
      %s350 = smul.addr %s349, 8
      %s351 = smul.addr %s350, 8
      %s352 = scalar_lea.vmem %s8, %s351
      %p353 = scmp.lt.s32.totalorder %s21, 1
      %s354 = scalar_select %p353, %s21, 1
      %s355 = smul.addr %s354, 2
      %s356 = smul.addr %s355, 2
      %s357 = scalar_lea.vmem %s9, %s356
      %v361 = vlaneseq
      %v362 = vand.u32 %v361, 127
      %v363 = vadd.s32 %v362, 128
      %vm364 = vcmp.lt.s32.totalorder %v362, 0
      %v365 = vsub.s32 0, %v362
      %v366 = vsel %vm364, %v365, %v362
      %v367 = vshrl.u32 %v366, 4
      %v368 = vand.u32 %v366, 15
      %v369 = vsub.s32 0, %v368
      %v370 = vsel %vm364, %v369, %v368
      %vm371 = vcmp.lt.s32.totalorder %v363, 0
      %v372 = vsub.s32 0, %v363
      %v373 = vsel %vm371, %v372, %v363
      %v374 = vshrl.u32 %v373, 4
      %v375 = vand.u32 %v373, 15
      %v376 = vsub.s32 0, %v375
      %v377 = vsel %vm371, %v376, %v375
      %vm378 = vcmp.ne.s32.totalorder %v370, 0
      %vm379 = vcmp.ne.s32.totalorder %v377, 0
      %vm380 = vcmp.lt.s32.totalorder %v370, 0
      %vm381 = vcmp.lt.s32.totalorder %v377, 0
      %vm382 = vmand %vm380, %vm378
      %vm383 = vmand %vm381, %vm379
      %v384 = vadd.s32 %v370, 16
      %v385 = vadd.s32 %v377, 16
      %v386 = vsel %vm382, %v384, %v370
      %v387 = vsel %vm383, %v385, %v377
      %vm388 = vcmp.gt.s32.totalorder %v386, 0
      %vm389 = vcmp.gt.s32.totalorder %v387, 0
      %vm390 = vcmp.lt.s32.totalorder %v386, 15
      %vm391 = vcmp.lt.s32.totalorder %v387, 15
      %v392 = vld [vmem:[%s342] sm:$0xff]
      %v394 = vunpack.c.l.b16 %v392
      %v395 = vunpack.c.h.b16 %v392
      %v396 = vpack.c.b16 %v394, %v394
      %v397 = vpack.c.b16 %v395, %v395
      %398 = vrot.lane.b32.xlu0 %v396, 1
      %v399 = vpop.permute.xlu0 %398
      %400 = vrot.lane.b32.xlu0 %v397, 1
      %v401 = vpop.permute.xlu0 %400
      %vm402 = vcmask 7168
      %v403 = vsel %vm402, %v399, %v401
      %vm405 = vcmask 7168
      %v408 = vsel %vm405, 0, %v399
      %v410 = vsel %vm388, 1, 0
      %v411 = vsel %vm389, 1, 0
      %vm412 = vcmp.eq.s32.totalorder %v410, 1
      %vm413 = vcmp.eq.s32.totalorder %v411, 1
      %vm414 = vmpackc.low %vm413, %vm412
      %v415 = vsel %vm414, 65537, 0
      %v416 = vlaneseq
      %v417 = vshrl.u32 %v416, 7
      %v418 = vsub.s32 0, %v417
      %v419 = vrot.slane %v415, %v418
      %v420 = vlaneseq
      %v421 = vshrl.u32 %v420, 7
      %v422 = vsub.s32 4, %v421
      %v423 = vrot.slane %v415, %v422
      %vm424 = vcmp.ne.s16.totalorder %v419, 0
      %vm425 = vcmp.ne.s16.totalorder %v423, 0
      %v426 = vsel %vm424, %v408, 0
      %v427 = vsel %vm425, %v403, 0
      %428 = vrot.lane.b32.xlu0 %v396, 127
      %v429 = vpop.permute.xlu0 %428
      %430 = vrot.lane.b32.xlu0 %v397, 127
      %v431 = vpop.permute.xlu0 %430
      %vm432 = vcmask 1039360
      %v433 = vsel %vm432, %v429, %v431
      %vm435 = vcmask 1039360
      %v437 = vsel %vm435, %v431, 0
      %v439 = vsel %vm390, 1, 0
      %v440 = vsel %vm391, 1, 0
      %vm441 = vcmp.eq.s32.totalorder %v439, 1
      %vm442 = vcmp.eq.s32.totalorder %v440, 1
      %vm443 = vmpackc.low %vm442, %vm441
      %v444 = vsel %vm443, 65537, 0
      %v445 = vlaneseq
      %v446 = vshrl.u32 %v445, 7
      %v447 = vsub.s32 0, %v446
      %v448 = vrot.slane %v444, %v447
      %v449 = vlaneseq
      %v450 = vshrl.u32 %v449, 7
      %v451 = vsub.s32 4, %v450
      %v452 = vrot.slane %v444, %v451
      %vm453 = vcmp.ne.s16.totalorder %v448, 0
      %vm454 = vcmp.ne.s16.totalorder %v452, 0
      %v455 = vsel %vm453, %v433, 0
      %v456 = vsel %vm454, %v437, 0
      %vm457 = vcmask 1043456
      %v460 = vsel %vm457, %v426, %v396
      %v464 = vsel %vm457, %v427, %v397
      %470 = vrot.lane.b32.xlu0 %v460, 16
      %v471 = vpop.permute.xlu0 %470
      %472 = vrot.lane.b32.xlu0 %v464, 16
      %v473 = vpop.permute.xlu0 %472
      %474 = vrot.lane.b32.xlu0 %v455, 16
      %v475 = vpop.permute.xlu0 %474
      %476 = vrot.lane.b32.xlu0 %v456, 16
      %v477 = vpop.permute.xlu0 %476
      %vm478 = vcmask 130048
      %v479 = vsel %vm478, %v471, %v473
      %v480 = vsel %vm478, %v475, %v477
      %vm482 = vcmask 130048
      %v484 = vsel %vm482, 0, %v471
      %v487 = vsel %vm482, 0, %v475
      %v488 = vld [vmem:[%s1] sm:$0xf]
      %v489 = vld [vmem:[%s1 + $0x4] sm:$0xf]
      %s490 = scalar_lea.vmem %s1, 8
      %v491 = vld [vmem:[%s490] sm:$0xf]
      %v492 = vld [vmem:[%s490 + $0x4] sm:$0xf]
      %v495 = vunpack.c.l.b16 %v491
      %v496 = vunpack.c.l.b16 %v492
      %v497 = vpack.c.b16 %v496, %v495
      %vm498 = vcmask 195584
      %v500 = vsel %vm498, %v497, 0
      %v503 = vsel %vm457, %v455, 0
      %v506 = vsel %vm457, %v456, 0
      %508 = vmatprep.subr.bf16.mxu0 %v464
      %509 = vmatpush1.bf16.msra.mxu0 %v460
      %510 = vmatprep.subr.bf16.mxu0 %v506
      %511 = vmatpush1.bf16.msra.mxu0 %v503
      %512 = vmatprep.subr.bf16.mxu0 0
      %513 = vmatpush1.bf16.msra.mxu0 0
      %514 = vmatprep.subr.bf16.mxu0 0
      %515 = vmatpush1.bf16.msra.mxu0 0
      %516 = vmatprep.subr.bf16.mxu0 0
      %517 = vmatpush1.bf16.msra.mxu0 0
      %518 = vmatprep.subr.bf16.mxu0 0
      %519 = vmatpush1.bf16.msra.mxu0 0
      %520 = vmatprep.subr.bf16.mxu0 0
      %521 = vmatpush1.bf16.msra.mxu0 0
      %522 = vmatprep.subr.bf16.mxu0 0
      %523 = vmatpush1.bf16.msra.mxu0 0
      %524 = vmatprep.subr.bf16.mxu0 0
      %525 = vmatpush1.bf16.msra.mxu0 0
      %526 = vmatprep.subr.bf16.mxu0 0
      %527 = vmatpush1.bf16.msra.mxu0 0
      %528 = vmatprep.subr.bf16.mxu0 0
      %529 = vmatpush1.bf16.msra.mxu0 0
      %530 = vmatprep.subr.bf16.mxu0 0
      %531 = vmatpush1.bf16.msra.mxu0 0
      %532 = vmatprep.subr.bf16.mxu0 0
      %533 = vmatpush1.bf16.msra.mxu0 0
      %534 = vmatprep.subr.bf16.mxu0 0
      %535 = vmatpush1.bf16.msra.mxu0 0
      %536 = vmatprep.subr.bf16.mxu0 0
      %537 = vmatpush1.bf16.msra.mxu0 0
      %538 = vmatprep.subr.bf16.mxu0 0
      %539 = vmatpush1.bf16.msra.mxu0 0
      %540 = vmatprep.mubr.bf16.mxu0 0
      %541 = vmatmul.mubr.bf16.gmra.mrb[0].mxu0 %v500
      %v542 = vpop.f32.mrb[0].mxu0
      %v543 = vadd.f32 0.0, %v542
      %v544 = vpop.f32.mrb[0].mxu0
      %v545 = vadd.f32 0.0, %v544
      %v546 = vpop.f32.mrb[0].mxu0
      %v547 = vadd.f32 0.0, %v546
      %v548 = vpop.f32.mrb[0].mxu0
      %v549 = vadd.f32 0.0, %v548
      %550 = vdwg.mxu0
      %v553 = vunpack.c.l.b16 %v488
      %v554 = vunpack.c.l.b16 %v489
      %v555 = vpack.c.b16 %v554, %v553
      %v557 = vsel %vm498, %v555, 0
      %v559 = vsel %vm457, %v487, 0
      %v562 = vsel %vm457, %v480, 0
      %564 = vmatprep.subr.bf16.mxu0 %v479
      %565 = vmatpush1.bf16.msra.mxu0 %v484
      %566 = vmatprep.subr.bf16.mxu0 %v562
      %567 = vmatpush1.bf16.msra.mxu0 %v559
      %568 = vmatprep.subr.bf16.mxu0 0
      %569 = vmatpush1.bf16.msra.mxu0 0
      %570 = vmatprep.subr.bf16.mxu0 0
      %571 = vmatpush1.bf16.msra.mxu0 0
      %572 = vmatprep.subr.bf16.mxu0 0
      %573 = vmatpush1.bf16.msra.mxu0 0
      %574 = vmatprep.subr.bf16.mxu0 0
      %575 = vmatpush1.bf16.msra.mxu0 0
      %576 = vmatprep.subr.bf16.mxu0 0
      %577 = vmatpush1.bf16.msra.mxu0 0
      %578 = vmatprep.subr.bf16.mxu0 0
      %579 = vmatpush1.bf16.msra.mxu0 0
      %580 = vmatprep.subr.bf16.mxu0 0
      %581 = vmatpush1.bf16.msra.mxu0 0
      %582 = vmatprep.subr.bf16.mxu0 0
      %583 = vmatpush1.bf16.msra.mxu0 0
      %584 = vmatprep.subr.bf16.mxu0 0
      %585 = vmatpush1.bf16.msra.mxu0 0
      %586 = vmatprep.subr.bf16.mxu0 0
      %587 = vmatpush1.bf16.msra.mxu0 0
      %588 = vmatprep.subr.bf16.mxu0 0
      %589 = vmatpush1.bf16.msra.mxu0 0
      %590 = vmatprep.subr.bf16.mxu0 0
      %591 = vmatpush1.bf16.msra.mxu0 0
      %592 = vmatprep.subr.bf16.mxu0 0
      %593 = vmatpush1.bf16.msra.mxu0 0
      %594 = vmatprep.subr.bf16.mxu0 0
      %595 = vmatpush1.bf16.msra.mxu0 0
      %596 = vmatprep.mubr.bf16.mxu0 0
      %597 = vmatmul.mubr.bf16.gmra.mrb[0].mxu0 %v557
      %v598 = vpop.f32.mrb[0].mxu0
      %v599 = vadd.f32 %v543, %v598
      %v600 = vpop.f32.mrb[0].mxu0
      %v601 = vadd.f32 %v545, %v600
      %v602 = vpop.f32.mrb[0].mxu0
      %v603 = vadd.f32 %v547, %v602
      %v604 = vpop.f32.mrb[0].mxu0
      %v605 = vadd.f32 %v549, %v604
      %606 = vdwg.mxu0
      %607 = vrot.lane.b32.xlu0 %v460, 112
      %v608 = vpop.permute.xlu0 %607
      %609 = vrot.lane.b32.xlu0 %v464, 112
      %v610 = vpop.permute.xlu0 %609
      %611 = vrot.lane.b32.xlu0 %v455, 112
      %v612 = vpop.permute.xlu0 %611
      %613 = vrot.lane.b32.xlu0 %v456, 112
      %v614 = vpop.permute.xlu0 %613
      %vm615 = vcmask 916480
      %v616 = vsel %vm615, %v608, %v610
      %v617 = vsel %vm615, %v612, %v614
      %vm619 = vcmask 916480
      %v621 = vsel %vm619, %v610, 0
      %v624 = vsel %vm619, %v614, 0
      %s625 = scalar_lea.vmem %s1, 16
      %v626 = vld [vmem:[%s625] sm:$0xf]
      %v627 = vld [vmem:[%s625 + $0x4] sm:$0xf]
      %v630 = vunpack.c.l.b16 %v626
      %v631 = vunpack.c.l.b16 %v627
      %v632 = vpack.c.b16 %v631, %v630
      %v634 = vsel %vm498, %v632, 0
      %v637 = vsel %vm457, %v617, 0
      %v639 = vsel %vm457, %v624, 0
      %641 = vmatprep.subr.bf16.mxu0 %v621
      %642 = vmatpush1.bf16.msra.mxu0 %v616
      %643 = vmatprep.subr.bf16.mxu0 %v639
      %644 = vmatpush1.bf16.msra.mxu0 %v637
      %645 = vmatprep.subr.bf16.mxu0 0
      %646 = vmatpush1.bf16.msra.mxu0 0
      %647 = vmatprep.subr.bf16.mxu0 0
      %648 = vmatpush1.bf16.msra.mxu0 0
      %649 = vmatprep.subr.bf16.mxu0 0
      %650 = vmatpush1.bf16.msra.mxu0 0
      %651 = vmatprep.subr.bf16.mxu0 0
      %652 = vmatpush1.bf16.msra.mxu0 0
      %653 = vmatprep.subr.bf16.mxu0 0
      %654 = vmatpush1.bf16.msra.mxu0 0
      %655 = vmatprep.subr.bf16.mxu0 0
      %656 = vmatpush1.bf16.msra.mxu0 0
      %657 = vmatprep.subr.bf16.mxu0 0
      %658 = vmatpush1.bf16.msra.mxu0 0
      %659 = vmatprep.subr.bf16.mxu0 0
      %660 = vmatpush1.bf16.msra.mxu0 0
      %661 = vmatprep.subr.bf16.mxu0 0
      %662 = vmatpush1.bf16.msra.mxu0 0
      %663 = vmatprep.subr.bf16.mxu0 0
      %664 = vmatpush1.bf16.msra.mxu0 0
      %665 = vmatprep.subr.bf16.mxu0 0
      %666 = vmatpush1.bf16.msra.mxu0 0
      %667 = vmatprep.subr.bf16.mxu0 0
      %668 = vmatpush1.bf16.msra.mxu0 0
      %669 = vmatprep.subr.bf16.mxu0 0
      %670 = vmatpush1.bf16.msra.mxu0 0
      %671 = vmatprep.subr.bf16.mxu0 0
      %672 = vmatpush1.bf16.msra.mxu0 0
      %673 = vmatprep.mubr.bf16.mxu0 0
      %674 = vmatmul.mubr.bf16.gmra.mrb[0].mxu0 %v634
      %v675 = vpop.f32.mrb[0].mxu0
      %v676 = vadd.f32 0.0, %v675
      %v677 = vpop.f32.mrb[0].mxu0
      %v678 = vadd.f32 0.0, %v677
      %v679 = vpop.f32.mrb[0].mxu0
      %v680 = vadd.f32 0.0, %v679
      %v681 = vpop.f32.mrb[0].mxu0
      %v682 = vadd.f32 0.0, %v681
      %683 = vdwg.mxu0
      %v684 = vadd.f32 %v599, %v676
      %v685 = vadd.f32 %v601, %v678
      %v686 = vadd.f32 %v603, %v680
      %v687 = vadd.f32 %v605, %v682
      %v688 = vld [vmem:[%s2] sm:$0xff]
      %v689 = vld [vmem:[%s2 + $0x8] sm:$0xff]
      %691 = vset.pattern.permute.xlu0 0
      %692 = vperm.xlu0 %691, %v688
      %v693 = vpop.permute.xlu0 %692
      %696 = vset.pattern.permute.xlu0 0
      %697 = vperm.xlu0 %696, %v689
      %v698 = vpop.permute.xlu0 %697
      %v700 = vadd.f32 %v684, %v693
      %v701 = vadd.f32 %v685, %v693
      %v702 = vadd.f32 %v686, %v698
      %v703 = vadd.f32 %v687, %v698
      %v704 = vmax.f32 %v700, 0.0
      %v705 = vmax.f32 %v701, 0.0
      %v706 = vmax.f32 %v702, 0.0
      %v707 = vmax.f32 %v703, 0.0
      %708 = vst [vmem:[%s347] sm:$0xff] %v704
      %709 = vst [vmem:[%s347 + $0x8] sm:$0xff] %v705
      %710 = vst [vmem:[%s347 + $0x10] sm:$0xff] %v706
      %711 = vst [vmem:[%s347 + $0x18] sm:$0xff] %v707
      %v712 = vpack.c.bf16 %v706, %v704
      %v713 = vpack.c.bf16 %v707, %v705
      %716 = vrot.lane.b32.xlu0 %v712, 1
      %v717 = vpop.permute.xlu0 %716
      %718 = vrot.lane.b32.xlu0 %v713, 1
      %v719 = vpop.permute.xlu0 %718
      %v720 = vsel %vm402, %v717, %v719
      %v723 = vsel %vm405, 0, %v717
      %v725 = vsel %vm424, %v723, 0
      %v726 = vsel %vm425, %v720, 0
      %727 = vrot.lane.b32.xlu0 %v712, 127
      %v728 = vpop.permute.xlu0 %727
      %729 = vrot.lane.b32.xlu0 %v713, 127
      %v730 = vpop.permute.xlu0 %729
      %v731 = vsel %vm432, %v728, %v730
      %v734 = vsel %vm435, %v730, 0
      %v736 = vsel %vm453, %v731, 0
      %v737 = vsel %vm454, %v734, 0
      %742 = vrot.lane.b32.xlu0 %v725, 16
      %v743 = vpop.permute.xlu0 %742
      %744 = vrot.lane.b32.xlu0 %v726, 16
      %v745 = vpop.permute.xlu0 %744
      %746 = vrot.lane.b32.xlu0 %v712, 16
      %v747 = vpop.permute.xlu0 %746
      %748 = vrot.lane.b32.xlu0 %v713, 16
      %v749 = vpop.permute.xlu0 %748
      %750 = vrot.lane.b32.xlu0 %v736, 16
      %v751 = vpop.permute.xlu0 %750
      %752 = vrot.lane.b32.xlu0 %v737, 16
      %v753 = vpop.permute.xlu0 %752
      %v754 = vsel %vm478, %v743, %v745
      %v755 = vsel %vm478, %v747, %v749
      %v756 = vsel %vm478, %v751, %v753
      %v761 = vsel %vm482, 0, %v743
      %v764 = vsel %vm482, 0, %v747
      %v767 = vsel %vm482, 0, %v751
      %v769 = vld [vmem:[%s3] sm:$0xf]
      %v770 = vld [vmem:[%s3 + $0x4] sm:$0xf]
      %v771 = vld [vmem:[%s3 + $0x8] sm:$0xf]
      %v772 = vld [vmem:[%s3 + $0xc] sm:$0xf]
      %s773 = scalar_lea.vmem %s3, 16
      %v774 = vld [vmem:[%s773] sm:$0xf]
      %v775 = vld [vmem:[%s773 + $0x4] sm:$0xf]
      %v776 = vld [vmem:[%s773 + $0x8] sm:$0xf]
      %v777 = vld [vmem:[%s773 + $0xc] sm:$0xf]
      %v782 = vunpack.c.l.b16 %v774
      %v783 = vunpack.c.l.b16 %v775
      %v784 = vunpack.c.l.b16 %v776
      %v785 = vunpack.c.l.b16 %v777
      %v786 = vpack.c.b16 %v783, %v782
      %v787 = vpack.c.b16 %v785, %v784
      %vm788 = vcmask 392192
      %v790 = vsel %vm788, %v786, 0
      %v793 = vsel %vm788, %v787, 0
      %795 = vmatprep.subr.bf16.mxu0 %v726
      %796 = vmatpush1.bf16.msra.mxu0 %v725
      %797 = vmatprep.subr.bf16.mxu0 %v713
      %798 = vmatpush1.bf16.msra.mxu0 %v712
      %799 = vmatprep.subr.bf16.mxu0 %v737
      %800 = vmatpush1.bf16.msra.mxu0 %v736
      %801 = vmatprep.subr.bf16.mxu0 0
      %802 = vmatpush1.bf16.msra.mxu0 0
      %803 = vmatprep.subr.bf16.mxu0 0
      %804 = vmatpush1.bf16.msra.mxu0 0
      %805 = vmatprep.subr.bf16.mxu0 0
      %806 = vmatpush1.bf16.msra.mxu0 0
      %807 = vmatprep.subr.bf16.mxu0 0
      %808 = vmatpush1.bf16.msra.mxu0 0
      %809 = vmatprep.subr.bf16.mxu0 0
      %810 = vmatpush1.bf16.msra.mxu0 0
      %811 = vmatprep.subr.bf16.mxu0 0
      %812 = vmatpush1.bf16.msra.mxu0 0
      %813 = vmatprep.subr.bf16.mxu0 0
      %814 = vmatpush1.bf16.msra.mxu0 0
      %815 = vmatprep.subr.bf16.mxu0 0
      %816 = vmatpush1.bf16.msra.mxu0 0
      %817 = vmatprep.subr.bf16.mxu0 0
      %818 = vmatpush1.bf16.msra.mxu0 0
      %819 = vmatprep.subr.bf16.mxu0 0
      %820 = vmatpush1.bf16.msra.mxu0 0
      %821 = vmatprep.subr.bf16.mxu0 0
      %822 = vmatpush1.bf16.msra.mxu0 0
      %823 = vmatprep.subr.bf16.mxu0 0
      %824 = vmatpush1.bf16.msra.mxu0 0
      %825 = vmatprep.subr.bf16.mxu0 0
      %826 = vmatpush1.bf16.msra.mxu0 0
      %827 = vmatprep.mubr.bf16.mxu0 0
      %828 = vmatmul.mubr.bf16.gmra.mrb[0].mxu0 %v790
      %v829 = vpop.f32.mrb[0].mxu0
      %v830 = vadd.f32 0.0, %v829
      %v831 = vpop.f32.mrb[0].mxu0
      %v832 = vadd.f32 0.0, %v831
      %v833 = vpop.f32.mrb[0].mxu0
      %v834 = vadd.f32 0.0, %v833
      %v835 = vpop.f32.mrb[0].mxu0
      %v836 = vadd.f32 0.0, %v835
      %837 = vmatprep.mubr.bf16.mxu0 0
      %838 = vmatmul.mubr.bf16.gmra.mrb[0].mxu0 %v793
      %v839 = vpop.f32.mrb[0].mxu0
      %v840 = vadd.f32 0.0, %v839
      %v841 = vpop.f32.mrb[0].mxu0
      %v842 = vadd.f32 0.0, %v841
      %v843 = vpop.f32.mrb[0].mxu0
      %v844 = vadd.f32 0.0, %v843
      %v845 = vpop.f32.mrb[0].mxu0
      %v846 = vadd.f32 0.0, %v845
      %847 = vdwg.mxu0
      %v852 = vunpack.c.l.b16 %v769
      %v853 = vunpack.c.l.b16 %v770
      %v854 = vunpack.c.l.b16 %v771
      %v855 = vunpack.c.l.b16 %v772
      %v856 = vpack.c.b16 %v853, %v852
      %v857 = vpack.c.b16 %v855, %v854
      %v859 = vsel %vm788, %v856, 0
      %v862 = vsel %vm788, %v857, 0
      %864 = vmatprep.subr.bf16.mxu0 %v754
      %865 = vmatpush1.bf16.msra.mxu0 %v761
      %866 = vmatprep.subr.bf16.mxu0 %v755
      %867 = vmatpush1.bf16.msra.mxu0 %v764
      %868 = vmatprep.subr.bf16.mxu0 %v756
      %869 = vmatpush1.bf16.msra.mxu0 %v767
      %870 = vmatprep.subr.bf16.mxu0 0
      %871 = vmatpush1.bf16.msra.mxu0 0
      %872 = vmatprep.subr.bf16.mxu0 0
      %873 = vmatpush1.bf16.msra.mxu0 0
      %874 = vmatprep.subr.bf16.mxu0 0
      %875 = vmatpush1.bf16.msra.mxu0 0
      %876 = vmatprep.subr.bf16.mxu0 0
      %877 = vmatpush1.bf16.msra.mxu0 0
      %878 = vmatprep.subr.bf16.mxu0 0
      %879 = vmatpush1.bf16.msra.mxu0 0
      %880 = vmatprep.subr.bf16.mxu0 0
      %881 = vmatpush1.bf16.msra.mxu0 0
      %882 = vmatprep.subr.bf16.mxu0 0
      %883 = vmatpush1.bf16.msra.mxu0 0
      %884 = vmatprep.subr.bf16.mxu0 0
      %885 = vmatpush1.bf16.msra.mxu0 0
      %886 = vmatprep.subr.bf16.mxu0 0
      %887 = vmatpush1.bf16.msra.mxu0 0
      %888 = vmatprep.subr.bf16.mxu0 0
      %889 = vmatpush1.bf16.msra.mxu0 0
      %890 = vmatprep.subr.bf16.mxu0 0
      %891 = vmatpush1.bf16.msra.mxu0 0
      %892 = vmatprep.subr.bf16.mxu0 0
      %893 = vmatpush1.bf16.msra.mxu0 0
      %894 = vmatprep.subr.bf16.mxu0 0
      %895 = vmatpush1.bf16.msra.mxu0 0
      %896 = vmatprep.mubr.bf16.mxu0 0
      %897 = vmatmul.mubr.bf16.gmra.mrb[0].mxu0 %v859
      %v898 = vpop.f32.mrb[0].mxu0
      %v899 = vadd.f32 %v830, %v898
      %v900 = vpop.f32.mrb[0].mxu0
      %v901 = vadd.f32 %v832, %v900
      %v902 = vpop.f32.mrb[0].mxu0
      %v903 = vadd.f32 %v834, %v902
      %v904 = vpop.f32.mrb[0].mxu0
      %v905 = vadd.f32 %v836, %v904
      %906 = vmatprep.mubr.bf16.mxu0 0
      %907 = vmatmul.mubr.bf16.gmra.mrb[0].mxu0 %v862
      %v908 = vpop.f32.mrb[0].mxu0
      %v909 = vadd.f32 %v840, %v908
      %v910 = vpop.f32.mrb[0].mxu0
      %v911 = vadd.f32 %v842, %v910
      %v912 = vpop.f32.mrb[0].mxu0
      %v913 = vadd.f32 %v844, %v912
      %v914 = vpop.f32.mrb[0].mxu0
      %v915 = vadd.f32 %v846, %v914
      %916 = vdwg.mxu0
      %917 = vrot.lane.b32.xlu0 %v725, 112
      %v918 = vpop.permute.xlu0 %917
      %919 = vrot.lane.b32.xlu0 %v726, 112
      %v920 = vpop.permute.xlu0 %919
      %921 = vrot.lane.b32.xlu0 %v712, 112
      %v922 = vpop.permute.xlu0 %921
      %923 = vrot.lane.b32.xlu0 %v713, 112
      %v924 = vpop.permute.xlu0 %923
      %925 = vrot.lane.b32.xlu0 %v736, 112
      %v926 = vpop.permute.xlu0 %925
      %927 = vrot.lane.b32.xlu0 %v737, 112
      %v928 = vpop.permute.xlu0 %927
      %v929 = vsel %vm615, %v918, %v920
      %v930 = vsel %vm615, %v922, %v924
      %v931 = vsel %vm615, %v926, %v928
      %v936 = vsel %vm619, %v920, 0
      %v939 = vsel %vm619, %v924, 0
      %v942 = vsel %vm619, %v928, 0
      %s944 = scalar_lea.vmem %s3, 32
      %v945 = vld [vmem:[%s944] sm:$0xf]
      %v946 = vld [vmem:[%s944 + $0x4] sm:$0xf]
      %v947 = vld [vmem:[%s944 + $0x8] sm:$0xf]
      %v948 = vld [vmem:[%s944 + $0xc] sm:$0xf]
      %v953 = vunpack.c.l.b16 %v945
      %v954 = vunpack.c.l.b16 %v946
      %v955 = vunpack.c.l.b16 %v947
      %v956 = vunpack.c.l.b16 %v948
      %v957 = vpack.c.b16 %v954, %v953
      %v958 = vpack.c.b16 %v956, %v955
      %v960 = vsel %vm788, %v957, 0
      %v963 = vsel %vm788, %v958, 0
      %965 = vmatprep.subr.bf16.mxu0 %v936
      %966 = vmatpush1.bf16.msra.mxu0 %v929
      %967 = vmatprep.subr.bf16.mxu0 %v939
      %968 = vmatpush1.bf16.msra.mxu0 %v930
      %969 = vmatprep.subr.bf16.mxu0 %v942
      %970 = vmatpush1.bf16.msra.mxu0 %v931
      %971 = vmatprep.subr.bf16.mxu0 0
      %972 = vmatpush1.bf16.msra.mxu0 0
      %973 = vmatprep.subr.bf16.mxu0 0
      %974 = vmatpush1.bf16.msra.mxu0 0
      %975 = vmatprep.subr.bf16.mxu0 0
      %976 = vmatpush1.bf16.msra.mxu0 0
      %977 = vmatprep.subr.bf16.mxu0 0
      %978 = vmatpush1.bf16.msra.mxu0 0
      %979 = vmatprep.subr.bf16.mxu0 0
      %980 = vmatpush1.bf16.msra.mxu0 0
      %981 = vmatprep.subr.bf16.mxu0 0
      %982 = vmatpush1.bf16.msra.mxu0 0
      %983 = vmatprep.subr.bf16.mxu0 0
      %984 = vmatpush1.bf16.msra.mxu0 0
      %985 = vmatprep.subr.bf16.mxu0 0
      %986 = vmatpush1.bf16.msra.mxu0 0
      %987 = vmatprep.subr.bf16.mxu0 0
      %988 = vmatpush1.bf16.msra.mxu0 0
      %989 = vmatprep.subr.bf16.mxu0 0
      %990 = vmatpush1.bf16.msra.mxu0 0
      %991 = vmatprep.subr.bf16.mxu0 0
      %992 = vmatpush1.bf16.msra.mxu0 0
      %993 = vmatprep.subr.bf16.mxu0 0
      %994 = vmatpush1.bf16.msra.mxu0 0
      %995 = vmatprep.subr.bf16.mxu0 0
      %996 = vmatpush1.bf16.msra.mxu0 0
      %997 = vmatprep.mubr.bf16.mxu0 0
      %998 = vmatmul.mubr.bf16.gmra.mrb[0].mxu0 %v960
      %v999 = vpop.f32.mrb[0].mxu0
      %v1000 = vadd.f32 0.0, %v999
      %v1001 = vpop.f32.mrb[0].mxu0
      %v1002 = vadd.f32 0.0, %v1001
      %v1003 = vpop.f32.mrb[0].mxu0
      %v1004 = vadd.f32 0.0, %v1003
      %v1005 = vpop.f32.mrb[0].mxu0
      %v1006 = vadd.f32 0.0, %v1005
      %1007 = vmatprep.mubr.bf16.mxu0 0
      %1008 = vmatmul.mubr.bf16.gmra.mrb[0].mxu0 %v963
      %v1009 = vpop.f32.mrb[0].mxu0
      %v1010 = vadd.f32 0.0, %v1009
      %v1011 = vpop.f32.mrb[0].mxu0
      %v1012 = vadd.f32 0.0, %v1011
      %v1013 = vpop.f32.mrb[0].mxu0
      %v1014 = vadd.f32 0.0, %v1013
      %v1015 = vpop.f32.mrb[0].mxu0
      %v1016 = vadd.f32 0.0, %v1015
      %1017 = vdwg.mxu0
      %v1018 = vadd.f32 %v899, %v1000
      %v1019 = vadd.f32 %v901, %v1002
      %v1020 = vadd.f32 %v903, %v1004
      %v1021 = vadd.f32 %v905, %v1006
      %v1022 = vadd.f32 %v909, %v1010
      %v1023 = vadd.f32 %v911, %v1012
      %v1024 = vadd.f32 %v913, %v1014
      %v1025 = vadd.f32 %v915, %v1016
      %v1026 = vld [vmem:[%s4] sm:$0xff]
      %v1027 = vld [vmem:[%s4 + $0x8] sm:$0xff]
      %v1028 = vld [vmem:[%s4 + $0x10] sm:$0xff]
      %v1029 = vld [vmem:[%s4 + $0x18] sm:$0xff]
      %1031 = vset.pattern.permute.xlu0 0
      %1032 = vperm.xlu0 %1031, %v1026
      %v1033 = vpop.permute.xlu0 %1032
      %1036 = vset.pattern.permute.xlu0 0
      %1037 = vperm.xlu0 %1036, %v1027
      %v1038 = vpop.permute.xlu0 %1037
      %1041 = vset.pattern.permute.xlu0 0
      %1042 = vperm.xlu0 %1041, %v1028
      %v1043 = vpop.permute.xlu0 %1042
      %1046 = vset.pattern.permute.xlu0 0
      %1047 = vperm.xlu0 %1046, %v1029
      %v1048 = vpop.permute.xlu0 %1047
      %v1050 = vadd.f32 %v1018, %v1033
      %v1051 = vadd.f32 %v1019, %v1033
      %v1052 = vadd.f32 %v1020, %v1038
      %v1053 = vadd.f32 %v1021, %v1038
      %v1054 = vadd.f32 %v1022, %v1043
      %v1055 = vadd.f32 %v1023, %v1043
      %v1056 = vadd.f32 %v1024, %v1048
      %v1057 = vadd.f32 %v1025, %v1048
      %v1058 = vmax.f32 %v1050, 0.0
      %v1059 = vmax.f32 %v1051, 0.0
      %v1060 = vmax.f32 %v1052, 0.0
      %v1061 = vmax.f32 %v1053, 0.0
      %v1062 = vmax.f32 %v1054, 0.0
      %v1063 = vmax.f32 %v1055, 0.0
      %v1064 = vmax.f32 %v1056, 0.0
      %v1065 = vmax.f32 %v1057, 0.0
      %1066 = vst [vmem:[%s352] sm:$0xff] %v1058
      %1067 = vst [vmem:[%s352 + $0x8] sm:$0xff] %v1059
      %1068 = vst [vmem:[%s352 + $0x10] sm:$0xff] %v1060
      %1069 = vst [vmem:[%s352 + $0x18] sm:$0xff] %v1061
      %1070 = vst [vmem:[%s352 + $0x20] sm:$0xff] %v1062
      %1071 = vst [vmem:[%s352 + $0x28] sm:$0xff] %v1063
      %1072 = vst [vmem:[%s352 + $0x30] sm:$0xff] %v1064
      %1073 = vst [vmem:[%s352 + $0x38] sm:$0xff] %v1065
      %v1074 = vpack.c.bf16 %v1060, %v1058
      %v1075 = vpack.c.bf16 %v1061, %v1059
      %v1076 = vpack.c.bf16 %v1064, %v1062
      %v1077 = vpack.c.bf16 %v1065, %v1063
      %1082 = vrot.lane.b32.xlu0 %v1074, 1
      %v1083 = vpop.permute.xlu0 %1082
      %1084 = vrot.lane.b32.xlu0 %v1075, 1
      %v1085 = vpop.permute.xlu0 %1084
      %1086 = vrot.lane.b32.xlu0 %v1076, 1
      %v1087 = vpop.permute.xlu0 %1086
      %1088 = vrot.lane.b32.xlu0 %v1077, 1
      %v1089 = vpop.permute.xlu0 %1088
      %v1090 = vsel %vm402, %v1083, %v1085
      %v1091 = vsel %vm402, %v1087, %v1089
      %v1095 = vsel %vm405, 0, %v1083
      %v1098 = vsel %vm405, 0, %v1087
      %v1100 = vsel %vm424, %v1095, 0
      %v1101 = vsel %vm425, %v1090, 0
      %v1102 = vsel %vm424, %v1098, 0
      %v1103 = vsel %vm425, %v1091, 0
      %1104 = vrot.lane.b32.xlu0 %v1074, 127
      %v1105 = vpop.permute.xlu0 %1104
      %1106 = vrot.lane.b32.xlu0 %v1075, 127
      %v1107 = vpop.permute.xlu0 %1106
      %1108 = vrot.lane.b32.xlu0 %v1076, 127
      %v1109 = vpop.permute.xlu0 %1108
      %1110 = vrot.lane.b32.xlu0 %v1077, 127
      %v1111 = vpop.permute.xlu0 %1110
      %v1112 = vsel %vm432, %v1105, %v1107
      %v1113 = vsel %vm432, %v1109, %v1111
      %v1117 = vsel %vm435, %v1107, 0
      %v1120 = vsel %vm435, %v1111, 0
      %v1122 = vsel %vm453, %v1112, 0
      %v1123 = vsel %vm454, %v1117, 0
      %v1124 = vsel %vm453, %v1113, 0
      %v1125 = vsel %vm454, %v1120, 0
      %1134 = vrot.lane.b32.xlu0 %v1100, 16
      %v1135 = vpop.permute.xlu0 %1134
      %1136 = vrot.lane.b32.xlu0 %v1101, 16
      %v1137 = vpop.permute.xlu0 %1136
      %1138 = vrot.lane.b32.xlu0 %v1102, 16
      %v1139 = vpop.permute.xlu0 %1138
      %1140 = vrot.lane.b32.xlu0 %v1103, 16
      %v1141 = vpop.permute.xlu0 %1140
      %1142 = vrot.lane.b32.xlu0 %v1074, 16
      %v1143 = vpop.permute.xlu0 %1142
      %1144 = vrot.lane.b32.xlu0 %v1075, 16
      %v1145 = vpop.permute.xlu0 %1144
      %1146 = vrot.lane.b32.xlu0 %v1076, 16
      %v1147 = vpop.permute.xlu0 %1146
      %1148 = vrot.lane.b32.xlu0 %v1077, 16
      %v1149 = vpop.permute.xlu0 %1148
      %1150 = vrot.lane.b32.xlu0 %v1122, 16
      %v1151 = vpop.permute.xlu0 %1150
      %1152 = vrot.lane.b32.xlu0 %v1123, 16
      %v1153 = vpop.permute.xlu0 %1152
      %1154 = vrot.lane.b32.xlu0 %v1124, 16
      %v1155 = vpop.permute.xlu0 %1154
      %1156 = vrot.lane.b32.xlu0 %v1125, 16
      %v1157 = vpop.permute.xlu0 %1156
      %v1158 = vsel %vm478, %v1135, %v1137
      %v1159 = vsel %vm478, %v1139, %v1141
      %v1160 = vsel %vm478, %v1143, %v1145
      %v1161 = vsel %vm478, %v1147, %v1149
      %v1162 = vsel %vm478, %v1151, %v1153
      %v1163 = vsel %vm478, %v1155, %v1157
      %v1171 = vsel %vm482, 0, %v1135
      %v1174 = vsel %vm482, 0, %v1139
      %v1177 = vsel %vm482, 0, %v1143
      %v1180 = vsel %vm482, 0, %v1147
      %v1183 = vsel %vm482, 0, %v1151
      %v1186 = vsel %vm482, 0, %v1155
      %v1188 = vld [vmem:[%s5] sm:$0xf]
      %s1189 = scalar_lea.vmem %s5, 4
      %v1190 = vld [vmem:[%s1189] sm:$0xf]
      %vm1191 = vcmask 785408
      %v1193 = vsel %vm1191, %v1190, 0
      %1195 = vmatprep.subr.bf16.mxu0 %v1101
      %1196 = vmatpush1.bf16.msra.mxu0 %v1100
      %1197 = vmatprep.subr.bf16.mxu0 %v1103
      %1198 = vmatpush1.bf16.msra.mxu0 %v1102
      %1199 = vmatprep.subr.bf16.mxu0 %v1075
      %1200 = vmatpush1.bf16.msra.mxu0 %v1074
      %1201 = vmatprep.subr.bf16.mxu0 %v1077
      %1202 = vmatpush1.bf16.msra.mxu0 %v1076
      %1203 = vmatprep.subr.bf16.mxu0 %v1123
      %1204 = vmatpush1.bf16.msra.mxu0 %v1122
      %1205 = vmatprep.subr.bf16.mxu0 %v1125
      %1206 = vmatpush1.bf16.msra.mxu0 %v1124
      %1207 = vmatprep.subr.bf16.mxu0 0
      %1208 = vmatpush1.bf16.msra.mxu0 0
      %1209 = vmatprep.subr.bf16.mxu0 0
      %1210 = vmatpush1.bf16.msra.mxu0 0
      %1211 = vmatprep.subr.bf16.mxu0 0
      %1212 = vmatpush1.bf16.msra.mxu0 0
      %1213 = vmatprep.subr.bf16.mxu0 0
      %1214 = vmatpush1.bf16.msra.mxu0 0
      %1215 = vmatprep.subr.bf16.mxu0 0
      %1216 = vmatpush1.bf16.msra.mxu0 0
      %1217 = vmatprep.subr.bf16.mxu0 0
      %1218 = vmatpush1.bf16.msra.mxu0 0
      %1219 = vmatprep.subr.bf16.mxu0 0
      %1220 = vmatpush1.bf16.msra.mxu0 0
      %1221 = vmatprep.subr.bf16.mxu0 0
      %1222 = vmatpush1.bf16.msra.mxu0 0
      %1223 = vmatprep.subr.bf16.mxu0 0
      %1224 = vmatpush1.bf16.msra.mxu0 0
      %1225 = vmatprep.subr.bf16.mxu0 0
      %1226 = vmatpush1.bf16.msra.mxu0 0
      %1227 = vmatprep.mubr.bf16.mxu0 0
      %1228 = vmatmul.mubr.bf16.gmra.mrb[0].mxu0 %v1193
      %v1229 = vpop.f32.mrb[0].mxu0
      %v1230 = vadd.f32 0.0, %v1229
      %v1231 = vpop.f32.mrb[0].mxu0
      %v1232 = vadd.f32 0.0, %v1231
      %v1233 = vpop.f32.mrb[0].mxu0
      %v1234 = vpop.f32.mrb[0].mxu0
      %1235 = vdwg.mxu0
      %v1237 = vsel %vm1191, %v1188, 0
      %1239 = vmatprep.subr.bf16.mxu0 %v1158
      %1240 = vmatpush1.bf16.msra.mxu0 %v1171
      %1241 = vmatprep.subr.bf16.mxu0 %v1159
      %1242 = vmatpush1.bf16.msra.mxu0 %v1174
      %1243 = vmatprep.subr.bf16.mxu0 %v1160
      %1244 = vmatpush1.bf16.msra.mxu0 %v1177
      %1245 = vmatprep.subr.bf16.mxu0 %v1161
      %1246 = vmatpush1.bf16.msra.mxu0 %v1180
      %1247 = vmatprep.subr.bf16.mxu0 %v1162
      %1248 = vmatpush1.bf16.msra.mxu0 %v1183
      %1249 = vmatprep.subr.bf16.mxu0 %v1163
      %1250 = vmatpush1.bf16.msra.mxu0 %v1186
      %1251 = vmatprep.subr.bf16.mxu0 0
      %1252 = vmatpush1.bf16.msra.mxu0 0
      %1253 = vmatprep.subr.bf16.mxu0 0
      %1254 = vmatpush1.bf16.msra.mxu0 0
      %1255 = vmatprep.subr.bf16.mxu0 0
      %1256 = vmatpush1.bf16.msra.mxu0 0
      %1257 = vmatprep.subr.bf16.mxu0 0
      %1258 = vmatpush1.bf16.msra.mxu0 0
      %1259 = vmatprep.subr.bf16.mxu0 0
      %1260 = vmatpush1.bf16.msra.mxu0 0
      %1261 = vmatprep.subr.bf16.mxu0 0
      %1262 = vmatpush1.bf16.msra.mxu0 0
      %1263 = vmatprep.subr.bf16.mxu0 0
      %1264 = vmatpush1.bf16.msra.mxu0 0
      %1265 = vmatprep.subr.bf16.mxu0 0
      %1266 = vmatpush1.bf16.msra.mxu0 0
      %1267 = vmatprep.subr.bf16.mxu0 0
      %1268 = vmatpush1.bf16.msra.mxu0 0
      %1269 = vmatprep.subr.bf16.mxu0 0
      %1270 = vmatpush1.bf16.msra.mxu0 0
      %1271 = vmatprep.mubr.bf16.mxu0 0
      %1272 = vmatmul.mubr.bf16.gmra.mrb[0].mxu0 %v1237
      %v1273 = vpop.f32.mrb[0].mxu0
      %v1274 = vadd.f32 %v1230, %v1273
      %v1275 = vpop.f32.mrb[0].mxu0
      %v1276 = vadd.f32 %v1232, %v1275
      %v1277 = vpop.f32.mrb[0].mxu0
      %v1278 = vpop.f32.mrb[0].mxu0
      %1279 = vdwg.mxu0
      %1280 = vrot.lane.b32.xlu0 %v1100, 112
      %v1281 = vpop.permute.xlu0 %1280
      %1282 = vrot.lane.b32.xlu0 %v1101, 112
      %v1283 = vpop.permute.xlu0 %1282
      %1284 = vrot.lane.b32.xlu0 %v1102, 112
      %v1285 = vpop.permute.xlu0 %1284
      %1286 = vrot.lane.b32.xlu0 %v1103, 112
      %v1287 = vpop.permute.xlu0 %1286
      %1288 = vrot.lane.b32.xlu0 %v1074, 112
      %v1289 = vpop.permute.xlu0 %1288
      %1290 = vrot.lane.b32.xlu0 %v1075, 112
      %v1291 = vpop.permute.xlu0 %1290
      %1292 = vrot.lane.b32.xlu0 %v1076, 112
      %v1293 = vpop.permute.xlu0 %1292
      %1294 = vrot.lane.b32.xlu0 %v1077, 112
      %v1295 = vpop.permute.xlu0 %1294
      %1296 = vrot.lane.b32.xlu0 %v1122, 112
      %v1297 = vpop.permute.xlu0 %1296
      %1298 = vrot.lane.b32.xlu0 %v1123, 112
      %v1299 = vpop.permute.xlu0 %1298
      %1300 = vrot.lane.b32.xlu0 %v1124, 112
      %v1301 = vpop.permute.xlu0 %1300
      %1302 = vrot.lane.b32.xlu0 %v1125, 112
      %v1303 = vpop.permute.xlu0 %1302
      %v1304 = vsel %vm615, %v1281, %v1283
      %v1305 = vsel %vm615, %v1285, %v1287
      %v1306 = vsel %vm615, %v1289, %v1291
      %v1307 = vsel %vm615, %v1293, %v1295
      %v1308 = vsel %vm615, %v1297, %v1299
      %v1309 = vsel %vm615, %v1301, %v1303
      %v1317 = vsel %vm619, %v1283, 0
      %v1320 = vsel %vm619, %v1287, 0
      %v1323 = vsel %vm619, %v1291, 0
      %v1326 = vsel %vm619, %v1295, 0
      %v1329 = vsel %vm619, %v1299, 0
      %v1332 = vsel %vm619, %v1303, 0
      %s1334 = scalar_lea.vmem %s5, 8
      %v1335 = vld [vmem:[%s1334] sm:$0xf]
      %v1337 = vsel %vm1191, %v1335, 0
      %1339 = vmatprep.subr.bf16.mxu0 %v1317
      %1340 = vmatpush1.bf16.msra.mxu0 %v1304
      %1341 = vmatprep.subr.bf16.mxu0 %v1320
      %1342 = vmatpush1.bf16.msra.mxu0 %v1305
      %1343 = vmatprep.subr.bf16.mxu0 %v1323
      %1344 = vmatpush1.bf16.msra.mxu0 %v1306
      %1345 = vmatprep.subr.bf16.mxu0 %v1326
      %1346 = vmatpush1.bf16.msra.mxu0 %v1307
      %1347 = vmatprep.subr.bf16.mxu0 %v1329
      %1348 = vmatpush1.bf16.msra.mxu0 %v1308
      %1349 = vmatprep.subr.bf16.mxu0 %v1332
      %1350 = vmatpush1.bf16.msra.mxu0 %v1309
      %1351 = vmatprep.subr.bf16.mxu0 0
      %1352 = vmatpush1.bf16.msra.mxu0 0
      %1353 = vmatprep.subr.bf16.mxu0 0
      %1354 = vmatpush1.bf16.msra.mxu0 0
      %1355 = vmatprep.subr.bf16.mxu0 0
      %1356 = vmatpush1.bf16.msra.mxu0 0
      %1357 = vmatprep.subr.bf16.mxu0 0
      %1358 = vmatpush1.bf16.msra.mxu0 0
      %1359 = vmatprep.subr.bf16.mxu0 0
      %1360 = vmatpush1.bf16.msra.mxu0 0
      %1361 = vmatprep.subr.bf16.mxu0 0
      %1362 = vmatpush1.bf16.msra.mxu0 0
      %1363 = vmatprep.subr.bf16.mxu0 0
      %1364 = vmatpush1.bf16.msra.mxu0 0
      %1365 = vmatprep.subr.bf16.mxu0 0
      %1366 = vmatpush1.bf16.msra.mxu0 0
      %1367 = vmatprep.subr.bf16.mxu0 0
      %1368 = vmatpush1.bf16.msra.mxu0 0
      %1369 = vmatprep.subr.bf16.mxu0 0
      %1370 = vmatpush1.bf16.msra.mxu0 0
      %1371 = vmatprep.mubr.bf16.mxu0 0
      %1372 = vmatmul.mubr.bf16.gmra.mrb[0].mxu0 %v1337
      %v1373 = vpop.f32.mrb[0].mxu0
      %v1374 = vadd.f32 0.0, %v1373
      %v1375 = vpop.f32.mrb[0].mxu0
      %v1376 = vadd.f32 0.0, %v1375
      %v1377 = vpop.f32.mrb[0].mxu0
      %v1378 = vpop.f32.mrb[0].mxu0
      %1379 = vdwg.mxu0
      %v1380 = vadd.f32 %v1274, %v1374
      %v1381 = vadd.f32 %v1276, %v1376
      %v1382 = vld [vmem:[%s6] sm:$0xff]
      %1384 = vset.pattern.permute.xlu0 0
      %1385 = vperm.xlu0 %1384, %v1382
      %v1386 = vpop.permute.xlu0 %1385
      %v1388 = vadd.f32 %v1380, %v1386
      %v1389 = vadd.f32 %v1381, %v1386
      %v1390 = vmax.f32 %v1388, 0.0
      %v1391 = vmax.f32 %v1389, 0.0
      %v1394 = vcombine.low %v1390, %v1391
      %v1396 = vunpack.c.l.s4 1983009808
      %v1397 = vunpack.c.0.s8 %v1396
      %v1398 = vlaneseq
      %v1399 = vshrl.u32 %v1398, 7
      %v1400 = vsub.s32 %v1397, %v1399
      %v1401 = vrot.slane %v1394, %v1400
      %1403 = vst [vmem:[%s357] sm:$0xf] %v1401
      %p1404 = scmp.lt.s32.totalorder %s21, 1
      %s1405 = scalar_select %p1404, %s21, 1
      %s1406 = smul.addr %s1405, 4
      %s1407 = smul.addr %s1406, 8
      %s1408 = scalar_lea.vmem %s7, %s1407
      %p1409 = scmp.lt.s32.totalorder %s21, 1
      %s1410 = scalar_select %p1409, %s21, 1
      %s1411 = smul.addr %s1410, 8
      %s1412 = smul.addr %s1411, 8
      %s1413 = scalar_lea.vmem %s8, %s1412
      %p1414 = scmp.lt.s32.totalorder %s21, 1
      %s1415 = scalar_select %p1414, %s21, 1
      %s1416 = smul.addr %s1415, 2
      %s1417 = smul.addr %s1416, 2
      %s1418 = scalar_lea.vmem %s9, %s1417
      // Predicated region
      $region49: #{edge_feature_extractor.1} parent=47 // pred_check
        %p1419 = pneg %p191
      $region50: #{edge_feature_extractor.1} parent=47 // pred_check_branch
        %1421 = sbr.rel (%p1419) target = $region52
      $region51: #{edge_feature_extractor.1} parent=47 // pred_region
        _
      $region52: #{edge_feature_extractor.1} parent=47 // pred_fallthru
        _
      // Predicated region
      $region53: #{edge_feature_extractor.1} parent=47 // pred_check
        %p1422 = pneg %p217
      $region54: #{edge_feature_extractor.1} parent=47 // pred_check_branch
        %1424 = sbr.rel (%p1422) target = $region56
      $region55: #{edge_feature_extractor.1} parent=47 // pred_region
        _
      $region56: #{edge_feature_extractor.1} parent=47 // pred_fallthru
        _
      // Predicated region
      $region57: #{edge_feature_extractor.1} parent=47 // pred_check
        %p1425 = pneg %p243
      $region58: #{edge_feature_extractor.1} parent=47 // pred_check_branch
        %1427 = sbr.rel (%p1425) target = $region60
      $region59: #{edge_feature_extractor.1} parent=47 // pred_region
        _
      $region60: #{edge_feature_extractor.1} parent=47 // pred_fallthru
        _
    $region48: #{edge_feature_extractor.1} parent=5 // pred_fallthru
      _
    %p1428 = scmp.le.s32.totalorder 2, %s16
    // Predicated region
    $region61: #{edge_feature_extractor.1} parent=5 // pred_check
      %p1429 = pneg %p1428
    $region62: #{edge_feature_extractor.1} parent=5 // pred_check_branch
      %1431 = sbr.rel (%p1429) target = $region64
    $region63: #{edge_feature_extractor.1} parent=5 // pred_region
      %s1432 = ssub.s32 %s16, 2
      // Predicated region
      $region65: #{edge_feature_extractor.1} parent=63 // pred_check
        %p1433 = pneg %p197
      $region66: #{edge_feature_extractor.1} parent=63 // pred_check_branch
        %1435 = sbr.rel (%p1433) target = $region68
      $region67: #{edge_feature_extractor.1} parent=63 // pred_region
        %p1436 = scmp.lt.s32.totalorder %s22, 1
        %s1437 = scalar_select %p1436, %s22, 1
        %s1438 = smul.addr %s1437, 4
        %s1439 = smul.addr %s1438, 8
        %s1440 = scalar_lea.vmem %s7, %s1439
      $region68: #{edge_feature_extractor.1} parent=63 // pred_fallthru
        _
      // Predicated region
      $region69: #{edge_feature_extractor.1} parent=63 // pred_check
        %p1441 = pneg %p223
      $region70: #{edge_feature_extractor.1} parent=63 // pred_check_branch
        %1443 = sbr.rel (%p1441) target = $region72
      $region71: #{edge_feature_extractor.1} parent=63 // pred_region
        %p1444 = scmp.lt.s32.totalorder %s22, 1
        %s1445 = scalar_select %p1444, %s22, 1
        %s1446 = smul.addr %s1445, 8
        %s1447 = smul.addr %s1446, 8
        %s1448 = scalar_lea.vmem %s8, %s1447
      $region72: #{edge_feature_extractor.1} parent=63 // pred_fallthru
        _
      // Predicated region
      $region73: #{edge_feature_extractor.1} parent=63 // pred_check
        %p1449 = pneg %p249
      $region74: #{edge_feature_extractor.1} parent=63 // pred_check_branch
        %1451 = sbr.rel (%p1449) target = $region76
      $region75: #{edge_feature_extractor.1} parent=63 // pred_region
        %p1452 = scmp.lt.s32.totalorder %s22, 1
        %s1453 = scalar_select %p1452, %s22, 1
        %s1454 = smul.addr %s1453, 2
        %s1455 = smul.addr %s1454, 2
        %s1456 = scalar_lea.vmem %s9, %s1455
      $region76: #{edge_feature_extractor.1} parent=63 // pred_fallthru
        _
    $region64: #{edge_feature_extractor.1} parent=5 // pred_fallthru
      _
  $region6: #{edge_feature_extractor.1} parent=0 // loop_footer
    %s20 = sadd.s32 1, %s16
  $region7: #{edge_feature_extractor.1} parent=0 // loop_footer_branch
    %15 = sbr.rel target = $region3
  $region8: #{edge_feature_extractor.1} parent=0 // loop_exit
    _

</llo_original>
